<compile_context>
chip_gen: v7x
topology: tpu7x:2x2x1
jax: 0.10.0
libtpu: 0.0.40
codegen_flags: <defaults>
</compile_context>

<pallas_src>
import functools

import jax
import jax.numpy as jnp
import numpy as np
from jax import lax
from jax.experimental import pallas as pl
from jax.experimental.pallas import tpu as pltpu

BN_EPS = 1e-5


def _round_up(v, m):
    return (v + m - 1) // m * m


# ----------------------------------------------------------------------------
# Kernel 1: per-point MLP (k -> 64 -> 128 -> 1024) + max-pool over points.
# ----------------------------------------------------------------------------
def _tnet_pool_kernel(n_points, n_padded, tile_m,
                      x_ref, w1, b1, w2, b2, w3, b3,
                      o_ref, acc_ref):
    t = pl.program_id(1)
    last = pl.num_programs(1) - 1

    @pl.when(t == 0)
    def _():
        # -inf identity: layer-3 bias/ReLU are applied after the pool.
        acc_ref[...] = jnp.full(acc_ref.shape, -jnp.inf, acc_ref.dtype)

    def mm_relu(h, w, b):
        y = jnp.dot(h.astype(jnp.bfloat16), w[...],
                    preferred_element_type=jnp.float32)
        return jnp.maximum(y + b[...], 0.0)

    # Conv1d with kernel size 1 == matmul on channels-last point rows.
    h = x_ref[0]                       # (TM, Kpad) bf16
    h = mm_relu(h, w1, b1)             # (TM, 128)  (lanes 64..127 are zero)
    h = mm_relu(h, w2, b2)             # (TM, 128)
    # Layer 3: no bias / ReLU here -- both commute with the row max and are
    # applied once in the finalize.
    y3 = jnp.dot(h.astype(jnp.bfloat16), w3[...],
                 preferred_element_type=jnp.float32)   # (TM, 1024)

    def accumulate(y):
        # (TM,1024) -> (TM/8, 8, 1024): leading-axis max is pure VPU vmax;
        # the 8->1 sublane reduce is deferred to the finalize.
        tile_max = jnp.max(y.reshape(tile_m // 8, 8, -1), axis=0)
        acc_ref[...] = jnp.maximum(acc_ref[...], tile_max)

    if n_padded == n_points:  # static: no padded points at all
        accumulate(y3)
    else:
        # Only the last tile contains zero-padded points: gate the mask pass.
        @pl.when(t != last)
        def _():
            accumulate(y3)

        @pl.when(t == last)
        def _():
            row = t * tile_m + lax.broadcasted_iota(jnp.int32, (tile_m, 1), 0)
            accumulate(jnp.where(row < n_points, y3, -jnp.inf))

    @pl.when(t == last)
    def _():
        pooled = jnp.max(acc_ref[...], axis=0, keepdims=True)   # (1, 1024)
        # bias + ReLU of layer 3, hoisted past the (monotone) max-pool.
        o_ref[0] = jnp.maximum(pooled + b3[...], 0.0)


# ----------------------------------------------------------------------------
# Kernel 2: FC head on pooled features, batched over B (1024->512->256->k*k).
# ----------------------------------------------------------------------------
def _tnet_head_kernel(g_ref, wf1, bf1, wf2, bf2, wf3, bf3, o_ref):
    def mm_relu(h, w, b):
        y = jnp.dot(h.astype(jnp.bfloat16), w[...],
                    preferred_element_type=jnp.float32)
        return jnp.maximum(y + b[...], 0.0)

    g = g_ref[...]                     # (TB, 1024) f32
    g = mm_relu(g, wf1, bf1)           # (TB, 512)
    g = mm_relu(g, wf2, bf2)           # (TB, 256)
    out = jnp.dot(g.astype(jnp.bfloat16), wf3[...],
                  preferred_element_type=jnp.float32) + bf3[...]
    o_ref[...] = out                   # identity already folded into bf3


# ----------------------------------------------------------------------------
# Parameter construction (deterministic, synthetic).
# ----------------------------------------------------------------------------
def init_tnet_params(key, k):
    """Weights stored as (in, out); BN as (gamma, beta, mean, var) per channel."""
    dims = [(k, 64), (64, 128), (128, 1024), (1024, 512), (512, 256)]
    params = {}
    keys = jax.random.split(key, 6 * len(dims) + 2)
    ki = 0
    for li, (cin, cout) in enumerate(dims):
        params[f"w{li}"] = 0.1 * jax.random.normal(keys[ki], (cin, cout), jnp.float32); ki += 1
        params[f"b{li}"] = 0.1 * jax.random.normal(keys[ki], (cout,), jnp.float32); ki += 1
        params[f"gamma{li}"] = 1.0 + 0.1 * jax.random.normal(keys[ki], (cout,), jnp.float32); ki += 1
        params[f"beta{li}"] = 0.1 * jax.random.normal(keys[ki], (cout,), jnp.float32); ki += 1
        params[f"mean{li}"] = 0.1 * jax.random.normal(keys[ki], (cout,), jnp.float32); ki += 1
        params[f"var{li}"] = jax.random.uniform(keys[ki], (cout,), jnp.float32, 0.5, 1.5); ki += 1
    # fc3: 256 -> k*k, no BN / no ReLU
    params["w5"] = 0.1 * jax.random.normal(keys[ki], (256, k * k), jnp.float32); ki += 1
    params["b5"] = 0.1 * jax.random.normal(keys[ki], (k * k,), jnp.float32); ki += 1
    return params


# ----------------------------------------------------------------------------
# Wrapper: BN folding, padding/layout, two pallas_calls.
# ----------------------------------------------------------------------------
def tnet_forward(x, params, k, tile_m=2048):
    """x: (B, k, N) float32 (PyTorch NCW).  Returns (B, k, k) float32."""
    B, kin, N = x.shape
    assert kin == k
    KK = k * k
    KKpad = _round_up(max(KK, 128), 128)      # lane-dense output slab
    Kpad = _round_up(max(k, 8), 8)            # pad tiny input-channel dim

    # Large point tile (amortizes ~0.35us/grid-step overhead); multiple of 16
    # for bf16 sublane packing.
    TM = _round_up(min(tile_m, _round_up(N, 16)), 16)
    Npad = _round_up(N, TM)
    ntiles = Npad // TM

    # Channels-last slab, zero-padded along points and input channels, bf16.
    xt = jnp.transpose(x, (0, 2, 1))                          # (B, N, k)
    xt = jnp.pad(xt, ((0, 0), (0, Npad - N), (0, Kpad - k)))
    xt = xt.astype(jnp.bfloat16)                              # (B, Npad, Kpad)

    def fold_bn(li):
        s = params[f"gamma{li}"] / jnp.sqrt(params[f"var{li}"] + BN_EPS)
        shift = params[f"beta{li}"] - params[f"mean{li}"] * s
        w = params[f"w{li}"] * s[None, :]
        b = params[f"b{li}"] * s + shift
        return w, b

    ws, bs = [], []
    for li in range(5):
        w, b = fold_bn(li)
        ws.append(w)
        bs.append(b)

    # Lane-dense layer-1/2: pad the 64-channel stage to 128 lanes (zero cols
    # in w1/b1, zero rows in w2) and pad w1's input rows to Kpad.
    ws[0] = jnp.pad(ws[0], ((0, Kpad - k), (0, 64)))          # (Kpad, 128)
    bs[0] = jnp.pad(bs[0], (0, 64))                           # (128,)
    ws[1] = jnp.pad(ws[1], ((0, 64), (0, 0)))                 # (128, 128)

    # Final linear: fold the identity into the bias, pad output lanes.
    w5 = jnp.pad(params["w5"], ((0, 0), (0, KKpad - KK)))
    b5 = params["b5"] + jnp.eye(k, dtype=jnp.float32).reshape(KK)
    b5 = jnp.pad(b5, (0, KKpad - KK))

    # ---------------- kernel 1: point MLP + max-pool ----------------
    pool_args = [
        xt,
        ws[0].astype(jnp.bfloat16), bs[0].reshape(1, -1).astype(jnp.float32),
        ws[1].astype(jnp.bfloat16), bs[1].reshape(1, -1).astype(jnp.float32),
        ws[2].astype(jnp.bfloat16), bs[2].reshape(1, -1).astype(jnp.float32),
    ]

    def resident(arr):
        # Full-array block with a constant index_map -> fetched once, VMEM-resident.
        return pl.BlockSpec(arr.shape, lambda b, t: (0, 0))

    in_specs = [pl.BlockSpec((1, TM, Kpad), lambda b, t: (b, t, 0))]
    in_specs += [resident(a) for a in pool_args[1:]]

    pooled = pl.pallas_call(
        functools.partial(_tnet_pool_kernel, N, Npad, TM),
        out_shape=jax.ShapeDtypeStruct((B, 1, 1024), jnp.float32),
        grid_spec=pltpu.PrefetchScalarGridSpec(
            num_scalar_prefetch=0,
            grid=(B, ntiles),
            in_specs=in_specs,
            out_specs=pl.BlockSpec((1, 1, 1024), lambda b, t: (b, 0, 0)),
            scratch_shapes=[pltpu.VMEM((8, 1024), jnp.float32)],
        ),
        compiler_params=pltpu.CompilerParams(
            dimension_semantics=("parallel", "arbitrary"),
            vmem_limit_bytes=48 * 1024 * 1024,
        ),
    )(*pool_args)

    # ---------------- kernel 2: FC head, batched over B ----------------
    TB = min(_round_up(B, 8), 256)
    Bpad = _round_up(B, TB)
    g = pooled.reshape(B, 1024)
    g = jnp.pad(g, ((0, Bpad - B), (0, 0)))                   # (Bpad, 1024)

    head_args = [
        g,
        ws[3].astype(jnp.bfloat16), bs[3].reshape(1, -1).astype(jnp.float32),
        ws[4].astype(jnp.bfloat16), bs[4].reshape(1, -1).astype(jnp.float32),
        w5.astype(jnp.bfloat16), b5.reshape(1, -1).astype(jnp.float32),
    ]

    def resident_h(arr):
        return pl.BlockSpec(arr.shape, lambda i: (0, 0))

    head_in_specs = [pl.BlockSpec((TB, 1024), lambda i: (i, 0))]
    head_in_specs += [resident_h(a) for a in head_args[1:]]

    out = pl.pallas_call(
        _tnet_head_kernel,
        out_shape=jax.ShapeDtypeStruct((Bpad, KKpad), jnp.float32),
        grid_spec=pltpu.PrefetchScalarGridSpec(
            num_scalar_prefetch=0,
            grid=(Bpad // TB,),
            in_specs=head_in_specs,
            out_specs=pl.BlockSpec((TB, KKpad), lambda i: (i, 0)),
        ),
        compiler_params=pltpu.CompilerParams(
            dimension_semantics=("parallel",),
        ),
    )(*head_args)

    return out[:B, :KK].reshape(B, k, k)


# ----------------------------------------------------------------------------
# Plain-JAX f32 reference (mirrors the PyTorch forward, eval-mode BN).
# ----------------------------------------------------------------------------
def tnet_reference(x, params, k):
    B, _, N = x.shape
    h = jnp.transpose(x, (0, 2, 1)).reshape(B * N, k)

    def bn(y, li):
        g, b = params[f"gamma{li}"], params[f"beta{li}"]
        m, v = params[f"mean{li}"], params[f"var{li}"]
        return (y - m) / jnp.sqrt(v + BN_EPS) * g + b

    for li in range(3):
        h = jax.nn.relu(bn(h @ params[f"w{li}"] + params[f"b{li}"], li))
    h = jnp.max(h.reshape(B, N, -1), axis=1)
    for li in range(3, 5):
        h = jax.nn.relu(bn(h @ params[f"w{li}"] + params[f"b{li}"], li))
    out = h @ params["w5"] + params["b5"]
    out = out + jnp.eye(k, dtype=jnp.float32).reshape(1, k * k)
    return out.reshape(B, k, k)


if __name__ == "__main__":
    B, K, N = 2, 4, 24  # batch, point dimensionality (k), number of points

    key = jax.random.PRNGKey(0)
    kx, kp = jax.random.split(key)
    x = jax.random.normal(kx, (B, K, N), jnp.float32)
    params = init_tnet_params(kp, K)

    ref = tnet_reference(x, params, K)

    # Default tile: single point tile per batch row, padded rows masked there.
    out = jax.block_until_ready(tnet_forward(x, params, K))
    # bf16 matmuls with f32 accumulation vs pure-f32 reference -> loose tolerance.
    np.testing.assert_allclose(np.asarray(out), np.asarray(ref), rtol=5e-2, atol=5e-2)

    # Small tile: exercises multi-tile accumulation, -inf init and the
    # last-tile-only padding mask / finalize path.
    out2 = jax.block_until_ready(tnet_forward(x, params, K, tile_m=16))
    np.testing.assert_allclose(np.asarray(out2), np.asarray(ref), rtol=5e-2, atol=5e-2)

    assert out.shape == (B, K, K)
    print("KERNEL_OK")
</pallas_src>

<mosaic_0001>
module attributes {stable_mosaic.version = 11 : i64} {
  func.func @_tnet_pool_kernel(%arg0: i32, %arg1: i32, %arg2: memref<1x32x8xbf16, #tpu.memory_space<vmem>>, %arg3: memref<8x128xbf16, #tpu.memory_space<vmem>>, %arg4: memref<1x128xf32, #tpu.memory_space<vmem>>, %arg5: memref<128x128xbf16, #tpu.memory_space<vmem>>, %arg6: memref<1x128xf32, #tpu.memory_space<vmem>>, %arg7: memref<128x1024xbf16, #tpu.memory_space<vmem>>, %arg8: memref<1x1024xf32, #tpu.memory_space<vmem>>, %arg9: memref<1x1x1024xf32, #tpu.memory_space<vmem>>, %arg10: memref<8x1024xf32, #tpu.memory_space<vmem>>) attributes {dimension_semantics = [#tpu.dimension_semantics<parallel>, #tpu.dimension_semantics<arbitrary>], iteration_bounds = array<i64: 2, 1>, scalar_prefetch = 0 : i64, scratch_operands = 1 : i64, tpu.core_type = #tpu.core_type<tc>, window_params = [{transform_indices = @transform_0, window_bounds = array<i64: 1, 32, 8>}, {pipeline_mode = #tpu.pipeline_mode<synchronous>, transform_indices = @transform_1, window_bounds = array<i64: 8, 128>}, {pipeline_mode = #tpu.pipeline_mode<synchronous>, transform_indices = @transform_2, window_bounds = array<i64: 1, 128>}, {pipeline_mode = #tpu.pipeline_mode<synchronous>, transform_indices = @transform_3, window_bounds = array<i64: 128, 128>}, {pipeline_mode = #tpu.pipeline_mode<synchronous>, transform_indices = @transform_4, window_bounds = array<i64: 1, 128>}, {pipeline_mode = #tpu.pipeline_mode<synchronous>, transform_indices = @transform_5, window_bounds = array<i64: 128, 1024>}, {pipeline_mode = #tpu.pipeline_mode<synchronous>, transform_indices = @transform_6, window_bounds = array<i64: 1, 1024>}, {transform_indices = @transform_7, window_bounds = array<i64: 1, 1, 1024>}]} {
    %c0_i32 = arith.constant 0 : i32
    %0 = arith.cmpi eq, %arg1, %c0_i32 : i32
    %1 = arith.extui %0 : i1 to i32
    %c0_i32_0 = arith.constant 0 : i32
    %2 = arith.cmpi ne, %1, %c0_i32_0 : i32
    scf.if %2 {
      %cst_23 = arith.constant 0xFF800000 : f32
      %32 = vector.broadcast %cst_23 : f32 to vector<8x1024xf32>
      %c0_24 = arith.constant 0 : index
      %c0_25 = arith.constant 0 : index
      %33 = vector.load %arg10[%c0_24, %c0_25] : memref<8x1024xf32, #tpu.memory_space<vmem>>, vector<8x1024xf32>
      tpu.vector_store %arg10[%c0_24, %c0_25], %32 {strides = array<i32>} : memref<8x1024xf32, #tpu.memory_space<vmem>>, vector<8x1024xf32>,
    } else {
    }
    %c0 = arith.constant 0 : index
    %c0_1 = arith.constant 0 : index
    %c0_2 = arith.constant 0 : index
    %3 = vector.load %arg2[%c0, %c0_1, %c0_2] : memref<1x32x8xbf16, #tpu.memory_space<vmem>>, vector<1x32x8xbf16>
    %4 = vector.shape_cast %3 : vector<1x32x8xbf16> to vector<32x8xbf16>
    %c0_3 = arith.constant 0 : index
    %c0_4 = arith.constant 0 : index
    %5 = vector.load %arg3[%c0_3, %c0_4] : memref<8x128xbf16, #tpu.memory_space<vmem>>, vector<8x128xbf16>
    %cst = arith.constant dense<0.000000e+00> : vector<32x128xf32>
    %6 = tpu.matmul %4, %5, %cst {dimension_numbers = #tpu.dot_dimension_numbers<[1], [0], [0], [1], [0, 0, 1, 1], [], []>} : vector<32x8xbf16>, vector<8x128xbf16>, vector<32x128xf32> -> vector<32x128xf32>
    %c0_5 = arith.constant 0 : index
    %c0_6 = arith.constant 0 : index
    %7 = vector.load %arg4[%c0_5, %c0_6] : memref<1x128xf32, #tpu.memory_space<vmem>>, vector<1x128xf32>
    %8 = vector.broadcast %7 : vector<1x128xf32> to vector<32x128xf32>
    %9 = arith.addf %6, %8 : vector<32x128xf32>
    %cst_7 = arith.constant 0.000000e+00 : f32
    %10 = vector.broadcast %cst_7 : f32 to vector<32x128xf32>
    %11 = arith.maximumf %9, %10 : vector<32x128xf32>
    %12 = arith.truncf %11 : vector<32x128xf32> to vector<32x128xbf16>
    %c0_8 = arith.constant 0 : index
    %c0_9 = arith.constant 0 : index
    %13 = vector.load %arg5[%c0_8, %c0_9] : memref<128x128xbf16, #tpu.memory_space<vmem>>, vector<128x128xbf16>
    %cst_10 = arith.constant dense<0.000000e+00> : vector<32x128xf32>
    %14 = tpu.matmul %12, %13, %cst_10 {dimension_numbers = #tpu.dot_dimension_numbers<[1], [0], [0], [1], [0, 0, 1, 1], [], []>} : vector<32x128xbf16>, vector<128x128xbf16>, vector<32x128xf32> -> vector<32x128xf32>
    %c0_11 = arith.constant 0 : index
    %c0_12 = arith.constant 0 : index
    %15 = vector.load %arg6[%c0_11, %c0_12] : memref<1x128xf32, #tpu.memory_space<vmem>>, vector<1x128xf32>
    %16 = vector.broadcast %15 : vector<1x128xf32> to vector<32x128xf32>
    %17 = arith.addf %14, %16 : vector<32x128xf32>
    %cst_13 = arith.constant 0.000000e+00 : f32
    %18 = vector.broadcast %cst_13 : f32 to vector<32x128xf32>
    %19 = arith.maximumf %17, %18 : vector<32x128xf32>
    %20 = arith.truncf %19 : vector<32x128xf32> to vector<32x128xbf16>
    %c0_14 = arith.constant 0 : index
    %c0_15 = arith.constant 0 : index
    %21 = vector.load %arg7[%c0_14, %c0_15] : memref<128x1024xbf16, #tpu.memory_space<vmem>>, vector<128x1024xbf16>
    %cst_16 = arith.constant dense<0.000000e+00> : vector<32x1024xf32>
    %22 = tpu.matmul %20, %21, %cst_16 {dimension_numbers = #tpu.dot_dimension_numbers<[1], [0], [0], [1], [0, 0, 1, 1], [], []>} : vector<32x128xbf16>, vector<128x1024xbf16>, vector<32x1024xf32> -> vector<32x1024xf32>
    %c0_i32_17 = arith.constant 0 : i32
    %23 = arith.cmpi ne, %arg1, %c0_i32_17 : i32
    %24 = arith.extui %23 : i1 to i32
    %c0_i32_18 = arith.constant 0 : i32
    %25 = arith.cmpi ne, %24, %c0_i32_18 : i32
    scf.if %25 {
      %32 = vector.shape_cast %22 : vector<32x1024xf32> to vector<4x8x1024xf32>
      %cst_23 = arith.constant dense<0xFF800000> : vector<8x1024xf32>
      %33 = vector.multi_reduction <maximumf>, %32, %cst_23 [0] : vector<4x8x1024xf32> to vector<8x1024xf32>
      %c0_24 = arith.constant 0 : index
      %c0_25 = arith.constant 0 : index
      %34 = vector.load %arg10[%c0_24, %c0_25] : memref<8x1024xf32, #tpu.memory_space<vmem>>, vector<8x1024xf32>
      %35 = arith.maximumf %34, %33 : vector<8x1024xf32>
      %c0_26 = arith.constant 0 : index
      %c0_27 = arith.constant 0 : index
      %36 = vector.load %arg10[%c0_26, %c0_27] : memref<8x1024xf32, #tpu.memory_space<vmem>>, vector<8x1024xf32>
      tpu.vector_store %arg10[%c0_26, %c0_27], %35 {strides = array<i32>} : memref<8x1024xf32, #tpu.memory_space<vmem>>, vector<8x1024xf32>,
    } else {
    }
    %c0_i32_19 = arith.constant 0 : i32
    %26 = arith.cmpi eq, %arg1, %c0_i32_19 : i32
    %27 = arith.extui %26 : i1 to i32
    %c0_i32_20 = arith.constant 0 : i32
    %28 = arith.cmpi ne, %27, %c0_i32_20 : i32
    scf.if %28 {
      %c32_i32 = arith.constant 32 : i32
      %32 = arith.muli %arg1, %c32_i32 : i32
      %33 = tpu.iota {dimensions = array<i32: 0>} : vector<32x1xi32>
      %34 = vector.broadcast %32 : i32 to vector<32x1xi32>
      %35 = arith.addi %34, %33 : vector<32x1xi32>
      %c24_i32 = arith.constant 24 : i32
      %36 = vector.broadcast %c24_i32 : i32 to vector<32x1xi32>
      %37 = arith.cmpi slt, %35, %36 : vector<32x1xi32>
      %cst_23 = arith.constant 0xFF800000 : f32
      %38 = vector.shape_cast %37 : vector<32x1xi1> to vector<32x1xi1>
      %39 = vector.broadcast %38 : vector<32x1xi1> to vector<32x1024xi1>
      %40 = vector.broadcast %cst_23 : f32 to vector<32x1024xf32>
      %41 = arith.select %39, %22, %40 : vector<32x1024xi1>, vector<32x1024xf32>
      %42 = vector.shape_cast %41 : vector<32x1024xf32> to vector<4x8x1024xf32>
      %cst_24 = arith.constant dense<0xFF800000> : vector<8x1024xf32>
      %43 = vector.multi_reduction <maximumf>, %42, %cst_24 [0] : vector<4x8x1024xf32> to vector<8x1024xf32>
      %c0_25 = arith.constant 0 : index
      %c0_26 = arith.constant 0 : index
      %44 = vector.load %arg10[%c0_25, %c0_26] : memref<8x1024xf32, #tpu.memory_space<vmem>>, vector<8x1024xf32>
      %45 = arith.maximumf %44, %43 : vector<8x1024xf32>
      %c0_27 = arith.constant 0 : index
      %c0_28 = arith.constant 0 : index
      %46 = vector.load %arg10[%c0_27, %c0_28] : memref<8x1024xf32, #tpu.memory_space<vmem>>, vector<8x1024xf32>
      tpu.vector_store %arg10[%c0_27, %c0_28], %45 {strides = array<i32>} : memref<8x1024xf32, #tpu.memory_space<vmem>>, vector<8x1024xf32>,
    } else {
    }
    %c0_i32_21 = arith.constant 0 : i32
    %29 = arith.cmpi eq, %arg1, %c0_i32_21 : i32
    %30 = arith.extui %29 : i1 to i32
    %c0_i32_22 = arith.constant 0 : i32
    %31 = arith.cmpi ne, %30, %c0_i32_22 : i32
    scf.if %31 {
      %c0_23 = arith.constant 0 : index
      %c0_24 = arith.constant 0 : index
      %32 = vector.load %arg10[%c0_23, %c0_24] : memref<8x1024xf32, #tpu.memory_space<vmem>>, vector<8x1024xf32>
      %cst_25 = arith.constant dense<0xFF800000> : vector<1024xf32>
      %33 = vector.multi_reduction <maximumf>, %32, %cst_25 [0] : vector<8x1024xf32> to vector<1024xf32>
      %34 = vector.shape_cast %33 : vector<1024xf32> to vector<1x1024xf32>
      %c0_26 = arith.constant 0 : index
      %c0_27 = arith.constant 0 : index
      %35 = vector.load %arg8[%c0_26, %c0_27] : memref<1x1024xf32, #tpu.memory_space<vmem>>, vector<1x1024xf32>
      %36 = arith.addf %34, %35 : vector<1x1024xf32>
      %cst_28 = arith.constant 0.000000e+00 : f32
      %37 = vector.broadcast %cst_28 : f32 to vector<1x1024xf32>
      %38 = arith.maximumf %36, %37 : vector<1x1024xf32>
      %c0_29 = arith.constant 0 : index
      %c0_30 = arith.constant 0 : index
      %c0_31 = arith.constant 0 : index
      %39 = vector.load %arg9[%c0_29, %c0_30, %c0_31] : memref<1x1x1024xf32, #tpu.memory_space<vmem>>, vector<1x1x1024xf32>
      %40 = vector.shape_cast %39 : vector<1x1x1024xf32> to vector<1x1024xf32>
      %41 = vector.shape_cast %38 : vector<1x1024xf32> to vector<1x1x1024xf32>
      tpu.vector_store %arg9[%c0_29, %c0_30, %c0_31], %41 {strides = array<i32>} : memref<1x1x1024xf32, #tpu.memory_space<vmem>>, vector<1x1x1024xf32>,
    } else {
    }
    return
  }
  func.func @transform_0(%arg0: i32, %arg1: i32) -> (i32, i32, i32) {
    %c0_i32 = arith.constant 0 : i32
    %c0_i32_0 = arith.constant 0 : i32
    return %arg0, %arg1, %c0_i32 : i32, i32, i32
  }
  func.func @transform_1(%arg0: i32, %arg1: i32) -> (i32, i32) {
    %c0_i32 = arith.constant 0 : i32
    %c0_i32_0 = arith.constant 0 : i32
    %c0_i32_1 = arith.constant 0 : i32
    return %c0_i32, %c0_i32_0 : i32, i32
  }
  func.func @transform_2(%arg0: i32, %arg1: i32) -> (i32, i32) {
    %c0_i32 = arith.constant 0 : i32
    %c0_i32_0 = arith.constant 0 : i32
    %c0_i32_1 = arith.constant 0 : i32
    return %c0_i32, %c0_i32_0 : i32, i32
  }
  func.func @transform_3(%arg0: i32, %arg1: i32) -> (i32, i32) {
    %c0_i32 = arith.constant 0 : i32
    %c0_i32_0 = arith.constant 0 : i32
    %c0_i32_1 = arith.constant 0 : i32
    return %c0_i32, %c0_i32_0 : i32, i32
  }
  func.func @transform_4(%arg0: i32, %arg1: i32) -> (i32, i32) {
    %c0_i32 = arith.constant 0 : i32
    %c0_i32_0 = arith.constant 0 : i32
    %c0_i32_1 = arith.constant 0 : i32
    return %c0_i32, %c0_i32_0 : i32, i32
  }
  func.func @transform_5(%arg0: i32, %arg1: i32) -> (i32, i32) {
    %c0_i32 = arith.constant 0 : i32
    %c0_i32_0 = arith.constant 0 : i32
    %c0_i32_1 = arith.constant 0 : i32
    return %c0_i32, %c0_i32_0 : i32, i32
  }
  func.func @transform_6(%arg0: i32, %arg1: i32) -> (i32, i32) {
    %c0_i32 = arith.constant 0 : i32
    %c0_i32_0 = arith.constant 0 : i32
    %c0_i32_1 = arith.constant 0 : i32
    return %c0_i32, %c0_i32_0 : i32, i32
  }
  func.func @transform_7(%arg0: i32, %arg1: i32) -> (i32, i32, i32) {
    %c0_i32 = arith.constant 0 : i32
    %c0_i32_0 = arith.constant 0 : i32
    %c0_i32_1 = arith.constant 0 : i32
    return %arg0, %c0_i32, %c0_i32_0 : i32, i32, i32
  }
}

</mosaic_0001>

<llo_original>
// kernel: tpu_custom_call.1
$region0: #{tpu_custom_call.1}
  #allocation0 [shape = 'u32[]', space=smem, size = 0x4, offset = 0x4, fixed_abs, tag = 'smem constant byte address 0x4 - core index']
  #allocation1 [shape = 'u32[144,128]{1,0:T(1,128)}', space=vmem, size = 0x12000, scoped, tag = 'internal scratch']
  #allocation2 [shape = 'f32[8,1024]{1,0:T(8,128)}', space=vmem, size = 0x8000, scoped, tag = 'scratch operand']
  %s0 = inlined_call_operand.vmem [shape: bf16[2,32,8], index: 0, kind: input, shape index: {}]
  %s1 = inlined_call_operand.vmem [shape: bf16[8,128], index: 1, kind: input, shape index: {}]
  %s2 = inlined_call_operand.vmem [shape: f32[1,128], index: 2, kind: input, shape index: {}]
  %s3 = inlined_call_operand.hbm [shape: bf16[128,128], index: 3, kind: input, shape index: {}]
  %s4 = inlined_call_operand.vmem [shape: f32[1,128], index: 4, kind: input, shape index: {}]
  %s5 = inlined_call_operand.hbm [shape: bf16[128,1024], index: 5, kind: input, shape index: {}]
  %s6 = inlined_call_operand.vmem [shape: f32[1,1024], index: 6, kind: input, shape index: {}]
  %s7 = inlined_call_operand.hbm [shape: f32[2,1,1024], index: 7, kind: output, shape index: {}]
  %s8 = sld [smem:[#allocation0]]
  $region81: #{tpu_custom_call.1} parent=0
    _
  %s10 = ssub.s32 1, %s8
  %s11 = scalar_select 0, %s10, %s8
  $region1: #{tpu_custom_call.1} parent=0
    #allocation3 [shape = 'u8[32768]{0}', space=vmem, size = 0x8000, scoped, tag = 'input window, operand 3, single buffered']
    #allocation4 [shape = 's32[2]{0}', space=sflag, size = 0x8, scoped, tag = 'scoped memory for tpu_custom_call.1']
    #allocation5 [shape = 's32[2]{0}', space=sflag, size = 0x8, scoped, tag = 'scoped memory for tpu_custom_call.1']
    #allocation6 [shape = 'u8[262144]{0}', space=vmem, size = 0x40000, scoped, tag = 'input window, operand 5, single buffered']
    #allocation7 [shape = 's32[1]{0}', space=sflag, size = 0x4, scoped, tag = 'scoped memory for tpu_custom_call.1']
    #allocation8 [shape = 'u8[8192]{0}', space=vmem, size = 0x2000, scoped, tag = 'output window, operand 0']
    %12 = vsyncpa [#allocation4], 0
    %13 = vsyncpa [#allocation7], 0
    %14 = vsyncpa [#allocation5], 0
    %s15 = scalar_lea.sflag [#allocation5], 1
    %16 = vsyncpa %s15, 0
    loop: start=0, step=1, limit=4
    $region2: #{tpu_custom_call.1} parent=1 // loop_pre_header
      _
    $region3: #{tpu_custom_call.1} parent=1 // loop_header
      %s18 = sphi 0, %s22
      %p19 = scmp.ge.s32.totalorder %s18, 4
      %s25 = sphi 0, %s37
      %s26 = sphi 0, %s33
      %s27 = sphi 0, %s25
      %s28 = sphi 0, %s26
      %s29 = sphi 0, %s27
      %s30 = sphi 0, %s28
      %s42 = sphi 0, %s44
      %s45 = sphi 0, %s42
      %s46 = sphi 0, %s45
      %s62 = sphi 0, %s46
      %s66 = sphi 0, %s66
      %s68 = sphi 0, %s66
      %s69 = sphi 0, %s68
      %s83 = sphi 0, %s69
      %s87 = sphi 0, %s87
      %s89 = sphi 0, %s87
      %s90 = sphi 0, %s89
      %s104 = sphi 0, %s90
      %s108 = sphi 0, %s108
      %s110 = sphi 0, %s108
      %s111 = sphi 0, %s110
      %s125 = sphi 0, %s111
      %s129 = sphi 0, %s129
      %s131 = sphi 0, %s129
      %s132 = sphi 0, %s131
      %s146 = sphi 0, %s132
      %s150 = sphi 0, %s150
      %s152 = sphi 0, %s150
      %s153 = sphi 0, %s152
      %s167 = sphi 0, %s153
      %s171 = sphi 0, %s171
      %s173 = sphi 0, %s171
      %s174 = sphi 0, %s173
      %s188 = sphi 0, %s174
      %s194 = sphi 0, %s196
      %s197 = sphi 0, %s194
      %s198 = sphi 0, %s197
      %s214 = sphi 0, %s198
    $region4: #{tpu_custom_call.1} parent=1 // loop_header_branch
      %21 = sbr.rel (%p19) target = $region8
    $region5: #{tpu_custom_call.1} parent=1 // loop_body
      %s23 = ssub.s32 %s18, 1
      %s24 = ssub.s32 %s18, 2
      %s31 = sadd.s32 1, %s26
      %p32 = scmp.ge.s32.totalorder %s31, 1
      %s33 = scalar_select %p32, 0, %s31
      %s34 = sadd.s32 1, %s25
      %s35 = scalar_select %p32, %s34, %s25
      %p36 = scmp.ge.s32.totalorder %s35, 2
      %s37 = scalar_select %p36, 0, %s35
      %s38 = ssub.s32 %s25, %s37
      %s39 = ssub.s32 %s26, %s33
      %s40 = sor.u32 %s38, %s39
      %p41 = scmp.eq.s32.totalorder %s40, 0
      %s43 = sadd.s32 %s42, 1
      %s44 = scalar_select %p41, %s42, %s43
      %p47 = pneg %p41
      %p48 = scmp.eq.s32.totalorder %s18, 1
      %p49 = por %p47, %p48
      %p50 = scmp.ne.s32.totalorder %s42, %s45
      %p51 = scmp.eq.s32.totalorder %s18, 0
      %p52 = por %p50, %p51
      %p53 = scmp.ne.s32.totalorder %s42, %s45
      %p54 = scmp.eq.s32.totalorder %s23, 1
      %p55 = por %p53, %p54
      %p56 = scmp.ne.s32.totalorder %s45, %s46
      %p57 = scmp.eq.s32.totalorder %s23, 0
      %p58 = por %p56, %p57
      %p59 = scmp.ne.s32.totalorder %s45, %s46
      %p60 = scmp.eq.s32.totalorder %s24, 1
      %p61 = por %p59, %p60
      %p63 = scmp.ne.s32.totalorder %s46, %s62
      %p64 = scmp.eq.s32.totalorder %s24, 0
      %p65 = por %p63, %p64
      %s67 = sadd.s32 %s66, 1
      %p70 = scmp.eq.s32.totalorder %s18, 1
      %p71 = scmp.ne.s32.totalorder %s66, %s68
      %p72 = scmp.eq.s32.totalorder %s18, 0
      %p73 = por %p71, %p72
      %p74 = scmp.ne.s32.totalorder %s66, %s68
      %p75 = scmp.eq.s32.totalorder %s23, 1
      %p76 = por %p74, %p75
      %p77 = scmp.ne.s32.totalorder %s68, %s69
      %p78 = scmp.eq.s32.totalorder %s23, 0
      %p79 = por %p77, %p78
      %p80 = scmp.ne.s32.totalorder %s68, %s69
      %p81 = scmp.eq.s32.totalorder %s24, 1
      %p82 = por %p80, %p81
      %p84 = scmp.ne.s32.totalorder %s69, %s83
      %p85 = scmp.eq.s32.totalorder %s24, 0
      %p86 = por %p84, %p85
      %s88 = sadd.s32 %s87, 1
      %p91 = scmp.eq.s32.totalorder %s18, 1
      %p92 = scmp.ne.s32.totalorder %s87, %s89
      %p93 = scmp.eq.s32.totalorder %s18, 0
      %p94 = por %p92, %p93
      %p95 = scmp.ne.s32.totalorder %s87, %s89
      %p96 = scmp.eq.s32.totalorder %s23, 1
      %p97 = por %p95, %p96
      %p98 = scmp.ne.s32.totalorder %s89, %s90
      %p99 = scmp.eq.s32.totalorder %s23, 0
      %p100 = por %p98, %p99
      %p101 = scmp.ne.s32.totalorder %s89, %s90
      %p102 = scmp.eq.s32.totalorder %s24, 1
      %p103 = por %p101, %p102
      %p105 = scmp.ne.s32.totalorder %s90, %s104
      %p106 = scmp.eq.s32.totalorder %s24, 0
      %p107 = por %p105, %p106
      %s109 = sadd.s32 %s108, 1
      %p112 = scmp.eq.s32.totalorder %s18, 1
      %p113 = scmp.ne.s32.totalorder %s108, %s110
      %p114 = scmp.eq.s32.totalorder %s18, 0
      %p115 = por %p113, %p114
      %p116 = scmp.ne.s32.totalorder %s108, %s110
      %p117 = scmp.eq.s32.totalorder %s23, 1
      %p118 = por %p116, %p117
      %p119 = scmp.ne.s32.totalorder %s110, %s111
      %p120 = scmp.eq.s32.totalorder %s23, 0
      %p121 = por %p119, %p120
      %p122 = scmp.ne.s32.totalorder %s110, %s111
      %p123 = scmp.eq.s32.totalorder %s24, 1
      %p124 = por %p122, %p123
      %p126 = scmp.ne.s32.totalorder %s111, %s125
      %p127 = scmp.eq.s32.totalorder %s24, 0
      %p128 = por %p126, %p127
      %s130 = sadd.s32 %s129, 1
      %p133 = scmp.eq.s32.totalorder %s18, 1
      %p134 = scmp.ne.s32.totalorder %s129, %s131
      %p135 = scmp.eq.s32.totalorder %s18, 0
      %p136 = por %p134, %p135
      %p137 = scmp.ne.s32.totalorder %s129, %s131
      %p138 = scmp.eq.s32.totalorder %s23, 1
      %p139 = por %p137, %p138
      %p140 = scmp.ne.s32.totalorder %s131, %s132
      %p141 = scmp.eq.s32.totalorder %s23, 0
      %p142 = por %p140, %p141
      %p143 = scmp.ne.s32.totalorder %s131, %s132
      %p144 = scmp.eq.s32.totalorder %s24, 1
      %p145 = por %p143, %p144
      %p147 = scmp.ne.s32.totalorder %s132, %s146
      %p148 = scmp.eq.s32.totalorder %s24, 0
      %p149 = por %p147, %p148
      %s151 = sadd.s32 %s150, 1
      %p154 = scmp.eq.s32.totalorder %s18, 1
      %p155 = scmp.ne.s32.totalorder %s150, %s152
      %p156 = scmp.eq.s32.totalorder %s18, 0
      %p157 = por %p155, %p156
      %p158 = scmp.ne.s32.totalorder %s150, %s152
      %p159 = scmp.eq.s32.totalorder %s23, 1
      %p160 = por %p158, %p159
      %p161 = scmp.ne.s32.totalorder %s152, %s153
      %p162 = scmp.eq.s32.totalorder %s23, 0
      %p163 = por %p161, %p162
      %p164 = scmp.ne.s32.totalorder %s152, %s153
      %p165 = scmp.eq.s32.totalorder %s24, 1
      %p166 = por %p164, %p165
      %p168 = scmp.ne.s32.totalorder %s153, %s167
      %p169 = scmp.eq.s32.totalorder %s24, 0
      %p170 = por %p168, %p169
      %s172 = sadd.s32 %s171, 1
      %p175 = scmp.eq.s32.totalorder %s18, 1
      %p176 = scmp.ne.s32.totalorder %s171, %s173
      %p177 = scmp.eq.s32.totalorder %s18, 0
      %p178 = por %p176, %p177
      %p179 = scmp.ne.s32.totalorder %s171, %s173
      %p180 = scmp.eq.s32.totalorder %s23, 1
      %p181 = por %p179, %p180
      %p182 = scmp.ne.s32.totalorder %s173, %s174
      %p183 = scmp.eq.s32.totalorder %s23, 0
      %p184 = por %p182, %p183
      %p185 = scmp.ne.s32.totalorder %s173, %s174
      %p186 = scmp.eq.s32.totalorder %s24, 1
      %p187 = por %p185, %p186
      %p189 = scmp.ne.s32.totalorder %s174, %s188
      %p190 = scmp.eq.s32.totalorder %s24, 0
      %p191 = por %p189, %p190
      %s192 = ssub.s32 %s25, %s37
      %p193 = scmp.eq.s32.totalorder %s192, 0
      %s195 = sadd.s32 %s194, 1
      %s196 = scalar_select %p193, %s194, %s195
      %p199 = pneg %p193
      %p200 = scmp.eq.s32.totalorder %s18, 1
      %p201 = por %p199, %p200
      %p202 = scmp.ne.s32.totalorder %s194, %s197
      %p203 = scmp.eq.s32.totalorder %s18, 0
      %p204 = por %p202, %p203
      %p205 = scmp.ne.s32.totalorder %s194, %s197
      %p206 = scmp.eq.s32.totalorder %s23, 1
      %p207 = por %p205, %p206
      %p208 = scmp.ne.s32.totalorder %s197, %s198
      %p209 = scmp.eq.s32.totalorder %s23, 0
      %p210 = por %p208, %p209
      %p211 = scmp.ne.s32.totalorder %s197, %s198
      %p212 = scmp.eq.s32.totalorder %s24, 1
      %p213 = por %p211, %p212
      %p215 = scmp.ne.s32.totalorder %s198, %s214
      %p216 = scmp.eq.s32.totalorder %s24, 0
      %p217 = por %p215, %p216
      %p218 = scmp.le.s32.totalorder 1, %s18
      %p219 = scmp.lt.s32.totalorder %s18, 3
      %p220 = pnand %p218, %p219
      %p221 = pneg %p220
      // Predicated region
      $region9: #{tpu_custom_call.1} parent=5 // pred_check
        _
      $region10: #{tpu_custom_call.1} parent=5 // pred_check_branch
        %223 = sbr.rel (%p220) target = $region12
      $region11: #{tpu_custom_call.1} parent=5 // pred_region
        %s224 = ssub.s32 %s18, 1
        // Predicated region
        $region13: #{tpu_custom_call.1} parent=11 // pred_check
          %p225 = pneg %p79
        $region14: #{tpu_custom_call.1} parent=11 // pred_check_branch
          %227 = sbr.rel (%p225) target = $region16
        $region15: #{tpu_custom_call.1} parent=11 // pred_region
          _
        $region16: #{tpu_custom_call.1} parent=11 // pred_fallthru
          _
        // Predicated region
        $region17: #{tpu_custom_call.1} parent=11 // pred_check
          %p228 = pneg %p100
        $region18: #{tpu_custom_call.1} parent=11 // pred_check_branch
          %230 = sbr.rel (%p228) target = $region20
        $region19: #{tpu_custom_call.1} parent=11 // pred_region
          _
        $region20: #{tpu_custom_call.1} parent=11 // pred_fallthru
          _
        // Predicated region
        $region21: #{tpu_custom_call.1} parent=11 // pred_check
          %p231 = pneg %p121
        $region22: #{tpu_custom_call.1} parent=11 // pred_check_branch
          %233 = sbr.rel (%p231) target = $region24
        $region23: #{tpu_custom_call.1} parent=11 // pred_region
          %s235 = ssub.s32 1024, 1024
          %236 = vsyncadd [#allocation4], %s235
          %s237 = sshll.u32 [#allocation3], 4
          %s238 = int_to_ptr.vmem [resolvable:$true] %s237
          %243 = dma.hbm_to_vmem [thread:$0]  %s3, 1024, %s238, [#allocation4], 64, 64, 4
        $region24: #{tpu_custom_call.1} parent=11 // pred_fallthru
          _
        // Predicated region
        $region25: #{tpu_custom_call.1} parent=11 // pred_check
          %p244 = pneg %p142
        $region26: #{tpu_custom_call.1} parent=11 // pred_check_branch
          %246 = sbr.rel (%p244) target = $region28
        $region27: #{tpu_custom_call.1} parent=11 // pred_region
          _
        $region28: #{tpu_custom_call.1} parent=11 // pred_fallthru
          _
        // Predicated region
        $region29: #{tpu_custom_call.1} parent=11 // pred_check
          %p247 = pneg %p163
        $region30: #{tpu_custom_call.1} parent=11 // pred_check_branch
          %249 = sbr.rel (%p247) target = $region32
        $region31: #{tpu_custom_call.1} parent=11 // pred_region
          %s251 = ssub.s32 8192, 8192
          %252 = vsyncadd [#allocation7], %s251
          %s253 = sshll.u32 [#allocation6], 4
          %s254 = int_to_ptr.vmem [resolvable:$true] %s253
          %259 = dma.hbm_to_vmem [thread:$0]  %s5, 8192, %s254, [#allocation7], 512, 512, 32
        $region32: #{tpu_custom_call.1} parent=11 // pred_fallthru
          _
        // Predicated region
        $region33: #{tpu_custom_call.1} parent=11 // pred_check
          %p260 = pneg %p184
        $region34: #{tpu_custom_call.1} parent=11 // pred_check_branch
          %262 = sbr.rel (%p260) target = $region36
        $region35: #{tpu_custom_call.1} parent=11 // pred_region
          _
        $region36: #{tpu_custom_call.1} parent=11 // pred_fallthru
          _
      $region12: #{tpu_custom_call.1} parent=5 // pred_fallthru
        _
      %p263 = scmp.lt.s32.totalorder %s18, 2
      // Predicated region
      $region37: #{tpu_custom_call.1} parent=5 // pred_check
        %p264 = pneg %p263
      $region38: #{tpu_custom_call.1} parent=5 // pred_check_branch
        %266 = sbr.rel (%p264) target = $region40
      $region39: #{tpu_custom_call.1} parent=5 // pred_region
        // Predicated region
        $region41: #{tpu_custom_call.1} parent=39 // pred_check
          %p267 = pneg %p52
        $region42: #{tpu_custom_call.1} parent=39 // pred_check_branch
          %269 = sbr.rel (%p267) target = $region44
        $region43: #{tpu_custom_call.1} parent=39 // pred_region
          %s270 = smul.u32 4, %s26
          %p271 = scmp.lt.s32.totalorder %s25, 1
          %s272 = scalar_select %p271, %s25, 1
          %p273 = scmp.lt.s32.totalorder %s270, 3
          %s274 = scalar_select %p273, %s270, 3
          %s275 = smul.addr %s272, 4
          %s276 = sadd.s32 %s274, %s275
          %s277 = smul.addr %s276, 4
          %s278 = scalar_lea.vmem %s0, %s277
          %s279 = smul.u32 4, %s26
        $region44: #{tpu_custom_call.1} parent=39 // pred_fallthru
          _
      $region40: #{tpu_custom_call.1} parent=5 // pred_fallthru
        _
      %p280 = scmp.le.s32.totalorder 1, %s18
      %p281 = scmp.lt.s32.totalorder %s18, 3
      %p282 = pnand %p280, %p281
      %p283 = pneg %p282
      // Predicated region
      $region45: #{tpu_custom_call.1} parent=5 // pred_check
        _
      $region46: #{tpu_custom_call.1} parent=5 // pred_check_branch
        %285 = sbr.rel (%p282) target = $region48
      $region47: #{tpu_custom_call.1} parent=5 // pred_region
        %s286 = ssub.s32 %s18, 1
        // Predicated region
        $region49: #{tpu_custom_call.1} parent=47 // pred_check
          %p287 = pneg %p121
        $region50: #{tpu_custom_call.1} parent=47 // pred_check_branch
          %289 = sbr.rel (%p287) target = $region52
        $region51: #{tpu_custom_call.1} parent=47 // pred_region
          %290 = dma.done [#allocation4], 1024
        $region52: #{tpu_custom_call.1} parent=47 // pred_fallthru
          _
        // Predicated region
        $region53: #{tpu_custom_call.1} parent=47 // pred_check
          %p291 = pneg %p163
        $region54: #{tpu_custom_call.1} parent=47 // pred_check_branch
          %293 = sbr.rel (%p291) target = $region56
        $region55: #{tpu_custom_call.1} parent=47 // pred_region
          %294 = dma.done [#allocation7], 8192
        $region56: #{tpu_custom_call.1} parent=47 // pred_fallthru
          _
        %s295 = smul.u32 4, %s28
        %p296 = scmp.lt.s32.totalorder %s27, 1
        %s297 = scalar_select %p296, %s27, 1
        %p298 = scmp.lt.s32.totalorder %s295, 3
        %s299 = scalar_select %p298, %s295, 3
        %s300 = smul.addr %s297, 4
        %s301 = sadd.s32 %s299, %s300
        %s302 = smul.addr %s301, 4
        %s303 = scalar_lea.vmem %s0, %s302
        %p304 = pneg %p58
        %p305 = pneg %p55
        %p306 = pneg %p79
        %p307 = pneg %p76
        %p308 = pneg %p100
        %p309 = pneg %p97
        %p310 = pneg %p121
        %p311 = pneg %p118
        %p312 = pneg %p142
        %p313 = pneg %p139
        %p314 = pneg %p163
        %p315 = pneg %p160
        %p316 = pneg %p184
        %p317 = pneg %p181
        %p318 = pneg %p210
        %p319 = pneg %p207
        %s320 = sand.u32 %s197, 1
        %s321 = scalar_lea.sflag [#allocation5], %s320
        %s322 = sand.u32 %s197, 1
        %s323 = smul.addr %s322, 8
        %s324 = scalar_lea.vmem [#allocation8], %s323
        %s325 = smul.u32 4, %s28
        %p326 = scmp.lt.s32.totalorder %s27, 1
        %s327 = scalar_select %p326, %s27, 1
        %p328 = scmp.lt.s32.totalorder %s325, 3
        %s329 = scalar_select %p328, %s325, 3
        %s330 = smul.addr %s327, 4
        %s331 = sadd.s32 %s329, %s330
        %s332 = smul.addr %s331, 4
        %s333 = scalar_lea.vmem %s0, %s332
        %s334 = smul.u32 4, %s28
        %p336 = scmp.eq.s32.totalorder %s28, 0
        // Predicated region
        $region57: #{tpu_custom_call.1} parent=47 // pred_check
          %p337 = pneg %p336
        $region58: #{tpu_custom_call.1} parent=47 // pred_check_branch
          %339 = sbr.rel (%p337) target = $region60
        $region59: #{tpu_custom_call.1} parent=47 // pred_region
          %340 = vst [vmem:[#allocation2] sm:$0xff] -inf
          %341 = vst [vmem:[#allocation2 + $0x8] sm:$0xff] -inf
          %342 = vst [vmem:[#allocation2 + $0x10] sm:$0xff] -inf
          %343 = vst [vmem:[#allocation2 + $0x18] sm:$0xff] -inf
          %344 = vst [vmem:[#allocation2 + $0x20] sm:$0xff] -inf
          %345 = vst [vmem:[#allocation2 + $0x28] sm:$0xff] -inf
          %346 = vst [vmem:[#allocation2 + $0x30] sm:$0xff] -inf
          %347 = vst [vmem:[#allocation2 + $0x38] sm:$0xff] -inf
        $region60: #{tpu_custom_call.1} parent=47 // pred_fallthru
          _
        %v348 = vld [vmem:[%s333] sm:$0xf]
        %v349 = vld [vmem:[%s333 + $0x4] sm:$0xf]
        %v350 = vld [vmem:[%s333 + $0x8] sm:$0xf]
        %v351 = vld [vmem:[%s333 + $0xc] sm:$0xf]
        %v352 = vld [vmem:[%s1] sm:$0xf]
        %v353 = vld [vmem:[%s2] sm:$0x1]
        %v355 = vlaneseq
        %v356 = vshrl.u32 %v355, 7
        %v357 = vsub.s32 0, %v356
        %v358 = vrot.slane %v353, %v357
        %v364 = vunpack.c.l.b16 %v348
        %v365 = vunpack.c.l.b16 %v349
        %v366 = vunpack.c.l.b16 %v350
        %v367 = vunpack.c.l.b16 %v351
        %v368 = vpack.c.b16 %v365, %v364
        %v369 = vpack.c.b16 %v367, %v366
        %vm370 = vcmask 64512
        %v372 = vsel %vm370, %v368, 0
        %v375 = vsel %vm370, %v369, 0
        %vm377 = vcmask 1043456
        %v379 = vsel %vm377, %v352, 0
        %381 = vmatprep.subr.bf16.mxu0 0
        %382 = vmatpush1.bf16.msra.mxu0 %v379
        %383 = vmatprep.subr.bf16.mxu0 0
        %384 = vmatpush1.bf16.msra.mxu0 0
        %385 = vmatprep.subr.bf16.mxu0 0
        %386 = vmatpush1.bf16.msra.mxu0 0
        %387 = vmatprep.subr.bf16.mxu0 0
        %388 = vmatpush1.bf16.msra.mxu0 0
        %389 = vmatprep.subr.bf16.mxu0 0
        %390 = vmatpush1.bf16.msra.mxu0 0
        %391 = vmatprep.subr.bf16.mxu0 0
        %392 = vmatpush1.bf16.msra.mxu0 0
        %393 = vmatprep.subr.bf16.mxu0 0
        %394 = vmatpush1.bf16.msra.mxu0 0
        %395 = vmatprep.subr.bf16.mxu0 0
        %396 = vmatpush1.bf16.msra.mxu0 0
        %397 = vmatprep.subr.bf16.mxu0 0
        %398 = vmatpush1.bf16.msra.mxu0 0
        %399 = vmatprep.subr.bf16.mxu0 0
        %400 = vmatpush1.bf16.msra.mxu0 0
        %401 = vmatprep.subr.bf16.mxu0 0
        %402 = vmatpush1.bf16.msra.mxu0 0
        %403 = vmatprep.subr.bf16.mxu0 0
        %404 = vmatpush1.bf16.msra.mxu0 0
        %405 = vmatprep.subr.bf16.mxu0 0
        %406 = vmatpush1.bf16.msra.mxu0 0
        %407 = vmatprep.subr.bf16.mxu0 0
        %408 = vmatpush1.bf16.msra.mxu0 0
        %409 = vmatprep.subr.bf16.mxu0 0
        %410 = vmatpush1.bf16.msra.mxu0 0
        %411 = vmatprep.subr.bf16.mxu0 0
        %412 = vmatpush1.bf16.msra.mxu0 0
        %413 = vmatprep.mubr.bf16.mxu0 0
        %414 = vmatmul.mubr.bf16.gmra.mrb[0].mxu0 %v372
        %v415 = vpop.f32.mrb[0].mxu0
        %v416 = vadd.f32 %v358, %v415
        %v417 = vpop.f32.mrb[0].mxu0
        %v418 = vpop.f32.mrb[0].mxu0
        %v419 = vadd.f32 %v358, %v418
        %v420 = vpop.f32.mrb[0].mxu0
        %421 = vmatprep.mubr.bf16.mxu0 0
        %422 = vmatmul.mubr.bf16.gmra.mrb[0].mxu0 %v375
        %v423 = vpop.f32.mrb[0].mxu0
        %v424 = vadd.f32 %v358, %v423
        %v425 = vpop.f32.mrb[0].mxu0
        %v426 = vpop.f32.mrb[0].mxu0
        %v427 = vadd.f32 %v358, %v426
        %v428 = vpop.f32.mrb[0].mxu0
        %429 = vdwg.mxu0
        %v430 = vmax.f32 %v416, 0.0
        %v431 = vmax.f32 %v419, 0.0
        %v432 = vmax.f32 %v424, 0.0
        %v433 = vmax.f32 %v427, 0.0
        %v434 = vpack.c.bf16 %v431, %v430
        %v435 = vpack.c.bf16 %v433, %v432
        %v436 = vld [vmem:[#allocation3] sm:$0xf]
        %v437 = vld [vmem:[#allocation3 + $0x4] sm:$0xf]
        %v438 = vld [vmem:[#allocation3 + $0x8] sm:$0xf]
        %v439 = vld [vmem:[#allocation3 + $0xc] sm:$0xf]
        %v440 = vld [vmem:[#allocation3 + $0x10] sm:$0xf]
        %v441 = vld [vmem:[#allocation3 + $0x14] sm:$0xf]
        %v442 = vld [vmem:[#allocation3 + $0x18] sm:$0xf]
        %v443 = vld [vmem:[#allocation3 + $0x1c] sm:$0xf]
        %v444 = vld [vmem:[#allocation3 + $0x20] sm:$0xf]
        %v445 = vld [vmem:[#allocation3 + $0x24] sm:$0xf]
        %v446 = vld [vmem:[#allocation3 + $0x28] sm:$0xf]
        %v447 = vld [vmem:[#allocation3 + $0x2c] sm:$0xf]
        %v448 = vld [vmem:[#allocation3 + $0x30] sm:$0xf]
        %v449 = vld [vmem:[#allocation3 + $0x34] sm:$0xf]
        %v450 = vld [vmem:[#allocation3 + $0x38] sm:$0xf]
        %v451 = vld [vmem:[#allocation3 + $0x3c] sm:$0xf]
        %v452 = vld [vmem:[%s4] sm:$0x1]
        %v454 = vlaneseq
        %v455 = vshrl.u32 %v454, 7
        %v456 = vsub.s32 0, %v455
        %v457 = vrot.slane %v452, %v456
        %v475 = vunpack.c.l.b16 %v436
        %v476 = vunpack.c.l.b16 %v437
        %v477 = vunpack.c.l.b16 %v438
        %v478 = vunpack.c.l.b16 %v439
        %v479 = vunpack.c.l.b16 %v440
        %v480 = vunpack.c.l.b16 %v441
        %v481 = vunpack.c.l.b16 %v442
        %v482 = vunpack.c.l.b16 %v443
        %v483 = vunpack.c.l.b16 %v444
        %v484 = vunpack.c.l.b16 %v445
        %v485 = vunpack.c.l.b16 %v446
        %v486 = vunpack.c.l.b16 %v447
        %v487 = vunpack.c.l.b16 %v448
        %v488 = vunpack.c.l.b16 %v449
        %v489 = vunpack.c.l.b16 %v450
        %v490 = vunpack.c.l.b16 %v451
        %v491 = vpack.c.b16 %v476, %v475
        %v492 = vpack.c.b16 %v478, %v477
        %v493 = vpack.c.b16 %v480, %v479
        %v494 = vpack.c.b16 %v482, %v481
        %v495 = vpack.c.b16 %v484, %v483
        %v496 = vpack.c.b16 %v486, %v485
        %v497 = vpack.c.b16 %v488, %v487
        %v498 = vpack.c.b16 %v490, %v489
        %507 = vmatprep.subr.bf16.mxu0 0
        %508 = vmatpush1.bf16.msra.mxu0 %v491
        %509 = vmatprep.subr.bf16.mxu0 0
        %510 = vmatpush1.bf16.msra.mxu0 %v492
        %511 = vmatprep.subr.bf16.mxu0 0
        %512 = vmatpush1.bf16.msra.mxu0 %v493
        %513 = vmatprep.subr.bf16.mxu0 0
        %514 = vmatpush1.bf16.msra.mxu0 %v494
        %515 = vmatprep.subr.bf16.mxu0 0
        %516 = vmatpush1.bf16.msra.mxu0 %v495
        %517 = vmatprep.subr.bf16.mxu0 0
        %518 = vmatpush1.bf16.msra.mxu0 %v496
        %519 = vmatprep.subr.bf16.mxu0 0
        %520 = vmatpush1.bf16.msra.mxu0 %v497
        %521 = vmatprep.subr.bf16.mxu0 0
        %522 = vmatpush1.bf16.msra.mxu0 %v498
        %523 = vmatprep.subr.bf16.mxu0 0
        %524 = vmatpush1.bf16.msra.mxu0 0
        %525 = vmatprep.subr.bf16.mxu0 0
        %526 = vmatpush1.bf16.msra.mxu0 0
        %527 = vmatprep.subr.bf16.mxu0 0
        %528 = vmatpush1.bf16.msra.mxu0 0
        %529 = vmatprep.subr.bf16.mxu0 0
        %530 = vmatpush1.bf16.msra.mxu0 0
        %531 = vmatprep.subr.bf16.mxu0 0
        %532 = vmatpush1.bf16.msra.mxu0 0
        %533 = vmatprep.subr.bf16.mxu0 0
        %534 = vmatpush1.bf16.msra.mxu0 0
        %535 = vmatprep.subr.bf16.mxu0 0
        %536 = vmatpush1.bf16.msra.mxu0 0
        %537 = vmatprep.subr.bf16.mxu0 0
        %538 = vmatpush1.bf16.msra.mxu0 0
        %539 = vmatprep.mubr.bf16.mxu0 0
        %540 = vmatmul.mubr.bf16.gmra.mrb[0].mxu0 %v434
        %v541 = vpop.f32.mrb[0].mxu0
        %v542 = vadd.f32 %v457, %v541
        %v543 = vpop.f32.mrb[0].mxu0
        %v544 = vpop.f32.mrb[0].mxu0
        %v545 = vadd.f32 %v457, %v544
        %v546 = vpop.f32.mrb[0].mxu0
        %547 = vmatprep.mubr.bf16.mxu0 0
        %548 = vmatmul.mubr.bf16.gmra.mrb[0].mxu0 %v435
        %v549 = vpop.f32.mrb[0].mxu0
        %v550 = vadd.f32 %v457, %v549
        %v551 = vpop.f32.mrb[0].mxu0
        %v552 = vpop.f32.mrb[0].mxu0
        %v553 = vadd.f32 %v457, %v552
        %v554 = vpop.f32.mrb[0].mxu0
        %555 = vdwg.mxu0
        %v556 = vmax.f32 %v542, 0.0
        %v557 = vmax.f32 %v545, 0.0
        %v558 = vmax.f32 %v550, 0.0
        %v559 = vmax.f32 %v553, 0.0
        %v560 = vpack.c.bf16 %v557, %v556
        %v561 = vpack.c.bf16 %v559, %v558
        %v562 = vld [vmem:[#allocation6] sm:$0xff]
        %v563 = vld [vmem:[#allocation6 + $0x8] sm:$0xff]
        %v564 = vld [vmem:[#allocation6 + $0x10] sm:$0xff]
        %v565 = vld [vmem:[#allocation6 + $0x18] sm:$0xff]
        %v566 = vld [vmem:[#allocation6 + $0x20] sm:$0xff]
        %v567 = vld [vmem:[#allocation6 + $0x28] sm:$0xff]
        %v568 = vld [vmem:[#allocation6 + $0x30] sm:$0xff]
        %v569 = vld [vmem:[#allocation6 + $0x38] sm:$0xff]
        %v570 = vld [vmem:[#allocation6 + $0x40] sm:$0xff]
        %v571 = vld [vmem:[#allocation6 + $0x48] sm:$0xff]
        %v572 = vld [vmem:[#allocation6 + $0x50] sm:$0xff]
        %v573 = vld [vmem:[#allocation6 + $0x58] sm:$0xff]
        %v574 = vld [vmem:[#allocation6 + $0x60] sm:$0xff]
        %v575 = vld [vmem:[#allocation6 + $0x68] sm:$0xff]
        %v576 = vld [vmem:[#allocation6 + $0x70] sm:$0xff]
        %v577 = vld [vmem:[#allocation6 + $0x78] sm:$0xff]
        %v578 = vld [vmem:[#allocation6 + $0x80] sm:$0xff]
        %v579 = vld [vmem:[#allocation6 + $0x88] sm:$0xff]
        %v580 = vld [vmem:[#allocation6 + $0x90] sm:$0xff]
        %v581 = vld [vmem:[#allocation6 + $0x98] sm:$0xff]
        %v582 = vld [vmem:[#allocation6 + $0xa0] sm:$0xff]
        %v583 = vld [vmem:[#allocation6 + $0xa8] sm:$0xff]
        %v584 = vld [vmem:[#allocation6 + $0xb0] sm:$0xff]
        %v585 = vld [vmem:[#allocation6 + $0xb8] sm:$0xff]
        %v586 = vld [vmem:[#allocation6 + $0xc0] sm:$0xff]
        %v587 = vld [vmem:[#allocation6 + $0xc8] sm:$0xff]
        %v588 = vld [vmem:[#allocation6 + $0xd0] sm:$0xff]
        %v589 = vld [vmem:[#allocation6 + $0xd8] sm:$0xff]
        %v590 = vld [vmem:[#allocation6 + $0xe0] sm:$0xff]
        %v591 = vld [vmem:[#allocation6 + $0xe8] sm:$0xff]
        %v592 = vld [vmem:[#allocation6 + $0xf0] sm:$0xff]
        %v593 = vld [vmem:[#allocation6 + $0xf8] sm:$0xff]
        %v594 = vld [vmem:[#allocation6 + $0x100] sm:$0xff]
        %v595 = vld [vmem:[#allocation6 + $0x108] sm:$0xff]
        %v596 = vld [vmem:[#allocation6 + $0x110] sm:$0xff]
        %v597 = vld [vmem:[#allocation6 + $0x118] sm:$0xff]
        %v598 = vld [vmem:[#allocation6 + $0x120] sm:$0xff]
        %v599 = vld [vmem:[#allocation6 + $0x128] sm:$0xff]
        %v600 = vld [vmem:[#allocation6 + $0x130] sm:$0xff]
        %v601 = vld [vmem:[#allocation6 + $0x138] sm:$0xff]
        %v602 = vld [vmem:[#allocation6 + $0x140] sm:$0xff]
        %v603 = vld [vmem:[#allocation6 + $0x148] sm:$0xff]
        %v604 = vld [vmem:[#allocation6 + $0x150] sm:$0xff]
        %v605 = vld [vmem:[#allocation6 + $0x158] sm:$0xff]
        %v606 = vld [vmem:[#allocation6 + $0x160] sm:$0xff]
        %v607 = vld [vmem:[#allocation6 + $0x168] sm:$0xff]
        %v608 = vld [vmem:[#allocation6 + $0x170] sm:$0xff]
        %v609 = vld [vmem:[#allocation6 + $0x178] sm:$0xff]
        %v610 = vld [vmem:[#allocation6 + $0x180] sm:$0xff]
        %v611 = vld [vmem:[#allocation6 + $0x188] sm:$0xff]
        %v612 = vld [vmem:[#allocation6 + $0x190] sm:$0xff]
        %v613 = vld [vmem:[#allocation6 + $0x198] sm:$0xff]
        %v614 = vld [vmem:[#allocation6 + $0x1a0] sm:$0xff]
        %v615 = vld [vmem:[#allocation6 + $0x1a8] sm:$0xff]
        %v616 = vld [vmem:[#allocation6 + $0x1b0] sm:$0xff]
        %v617 = vld [vmem:[#allocation6 + $0x1b8] sm:$0xff]
        %v618 = vld [vmem:[#allocation6 + $0x1c0] sm:$0xff]
        %v619 = vld [vmem:[#allocation6 + $0x1c8] sm:$0xff]
        %v620 = vld [vmem:[#allocation6 + $0x1d0] sm:$0xff]
        %v621 = vld [vmem:[#allocation6 + $0x1d8] sm:$0xff]
        %v622 = vld [vmem:[#allocation6 + $0x1e0] sm:$0xff]
        %v623 = vld [vmem:[#allocation6 + $0x1e8] sm:$0xff]
        %v624 = vld [vmem:[#allocation6 + $0x1f0] sm:$0xff]
        %v625 = vld [vmem:[#allocation6 + $0x1f8] sm:$0xff]
        %v690 = vunpack.c.l.b16 %v562
        %v691 = vunpack.c.h.b16 %v562
        %v692 = vunpack.c.l.b16 %v563
        %v693 = vunpack.c.h.b16 %v563
        %v694 = vunpack.c.l.b16 %v564
        %v695 = vunpack.c.h.b16 %v564
        %v696 = vunpack.c.l.b16 %v565
        %v697 = vunpack.c.h.b16 %v565
        %v698 = vunpack.c.l.b16 %v566
        %v699 = vunpack.c.h.b16 %v566
        %v700 = vunpack.c.l.b16 %v567
        %v701 = vunpack.c.h.b16 %v567
        %v702 = vunpack.c.l.b16 %v568
        %v703 = vunpack.c.h.b16 %v568
        %v704 = vunpack.c.l.b16 %v569
        %v705 = vunpack.c.h.b16 %v569
        %v706 = vunpack.c.l.b16 %v570
        %v707 = vunpack.c.h.b16 %v570
        %v708 = vunpack.c.l.b16 %v571
        %v709 = vunpack.c.h.b16 %v571
        %v710 = vunpack.c.l.b16 %v572
        %v711 = vunpack.c.h.b16 %v572
        %v712 = vunpack.c.l.b16 %v573
        %v713 = vunpack.c.h.b16 %v573
        %v714 = vunpack.c.l.b16 %v574
        %v715 = vunpack.c.h.b16 %v574
        %v716 = vunpack.c.l.b16 %v575
        %v717 = vunpack.c.h.b16 %v575
        %v718 = vunpack.c.l.b16 %v576
        %v719 = vunpack.c.h.b16 %v576
        %v720 = vunpack.c.l.b16 %v577
        %v721 = vunpack.c.h.b16 %v577
        %v722 = vunpack.c.l.b16 %v578
        %v723 = vunpack.c.h.b16 %v578
        %v724 = vunpack.c.l.b16 %v579
        %v725 = vunpack.c.h.b16 %v579
        %v726 = vunpack.c.l.b16 %v580
        %v727 = vunpack.c.h.b16 %v580
        %v728 = vunpack.c.l.b16 %v581
        %v729 = vunpack.c.h.b16 %v581
        %v730 = vunpack.c.l.b16 %v582
        %v731 = vunpack.c.h.b16 %v582
        %v732 = vunpack.c.l.b16 %v583
        %v733 = vunpack.c.h.b16 %v583
        %v734 = vunpack.c.l.b16 %v584
        %v735 = vunpack.c.h.b16 %v584
        %v736 = vunpack.c.l.b16 %v585
        %v737 = vunpack.c.h.b16 %v585
        %v738 = vunpack.c.l.b16 %v586
        %v739 = vunpack.c.h.b16 %v586
        %v740 = vunpack.c.l.b16 %v587
        %v741 = vunpack.c.h.b16 %v587
        %v742 = vunpack.c.l.b16 %v588
        %v743 = vunpack.c.h.b16 %v588
        %v744 = vunpack.c.l.b16 %v589
        %v745 = vunpack.c.h.b16 %v589
        %v746 = vunpack.c.l.b16 %v590
        %v747 = vunpack.c.h.b16 %v590
        %v748 = vunpack.c.l.b16 %v591
        %v749 = vunpack.c.h.b16 %v591
        %v750 = vunpack.c.l.b16 %v592
        %v751 = vunpack.c.h.b16 %v592
        %v752 = vunpack.c.l.b16 %v593
        %v753 = vunpack.c.h.b16 %v593
        %v754 = vunpack.c.l.b16 %v594
        %v755 = vunpack.c.h.b16 %v594
        %v756 = vunpack.c.l.b16 %v595
        %v757 = vunpack.c.h.b16 %v595
        %v758 = vunpack.c.l.b16 %v596
        %v759 = vunpack.c.h.b16 %v596
        %v760 = vunpack.c.l.b16 %v597
        %v761 = vunpack.c.h.b16 %v597
        %v762 = vunpack.c.l.b16 %v598
        %v763 = vunpack.c.h.b16 %v598
        %v764 = vunpack.c.l.b16 %v599
        %v765 = vunpack.c.h.b16 %v599
        %v766 = vunpack.c.l.b16 %v600
        %v767 = vunpack.c.h.b16 %v600
        %v768 = vunpack.c.l.b16 %v601
        %v769 = vunpack.c.h.b16 %v601
        %v770 = vunpack.c.l.b16 %v602
        %v771 = vunpack.c.h.b16 %v602
        %v772 = vunpack.c.l.b16 %v603
        %v773 = vunpack.c.h.b16 %v603
        %v774 = vunpack.c.l.b16 %v604
        %v775 = vunpack.c.h.b16 %v604
        %v776 = vunpack.c.l.b16 %v605
        %v777 = vunpack.c.h.b16 %v605
        %v778 = vunpack.c.l.b16 %v606
        %v779 = vunpack.c.h.b16 %v606
        %v780 = vunpack.c.l.b16 %v607
        %v781 = vunpack.c.h.b16 %v607
        %v782 = vunpack.c.l.b16 %v608
        %v783 = vunpack.c.h.b16 %v608
        %v784 = vunpack.c.l.b16 %v609
        %v785 = vunpack.c.h.b16 %v609
        %v786 = vunpack.c.l.b16 %v610
        %v787 = vunpack.c.h.b16 %v610
        %v788 = vunpack.c.l.b16 %v611
        %v789 = vunpack.c.h.b16 %v611
        %v790 = vunpack.c.l.b16 %v612
        %v791 = vunpack.c.h.b16 %v612
        %v792 = vunpack.c.l.b16 %v613
        %v793 = vunpack.c.h.b16 %v613
        %v794 = vunpack.c.l.b16 %v614
        %v795 = vunpack.c.h.b16 %v614
        %v796 = vunpack.c.l.b16 %v615
        %v797 = vunpack.c.h.b16 %v615
        %v798 = vunpack.c.l.b16 %v616
        %v799 = vunpack.c.h.b16 %v616
        %v800 = vunpack.c.l.b16 %v617
        %v801 = vunpack.c.h.b16 %v617
        %v802 = vunpack.c.l.b16 %v618
        %v803 = vunpack.c.h.b16 %v618
        %v804 = vunpack.c.l.b16 %v619
        %v805 = vunpack.c.h.b16 %v619
        %v806 = vunpack.c.l.b16 %v620
        %v807 = vunpack.c.h.b16 %v620
        %v808 = vunpack.c.l.b16 %v621
        %v809 = vunpack.c.h.b16 %v621
        %v810 = vunpack.c.l.b16 %v622
        %v811 = vunpack.c.h.b16 %v622
        %v812 = vunpack.c.l.b16 %v623
        %v813 = vunpack.c.h.b16 %v623
        %v814 = vunpack.c.l.b16 %v624
        %v815 = vunpack.c.h.b16 %v624
        %v816 = vunpack.c.l.b16 %v625
        %v817 = vunpack.c.h.b16 %v625
        %v818 = vpack.c.b16 %v698, %v690
        %v819 = vpack.c.b16 %v699, %v691
        %v820 = vpack.c.b16 %v700, %v692
        %v821 = vpack.c.b16 %v701, %v693
        %v822 = vpack.c.b16 %v702, %v694
        %v823 = vpack.c.b16 %v703, %v695
        %v824 = vpack.c.b16 %v704, %v696
        %v825 = vpack.c.b16 %v705, %v697
        %v826 = vpack.c.b16 %v714, %v706
        %v827 = vpack.c.b16 %v715, %v707
        %v828 = vpack.c.b16 %v716, %v708
        %v829 = vpack.c.b16 %v717, %v709
        %v830 = vpack.c.b16 %v718, %v710
        %v831 = vpack.c.b16 %v719, %v711
        %v832 = vpack.c.b16 %v720, %v712
        %v833 = vpack.c.b16 %v721, %v713
        %v834 = vpack.c.b16 %v730, %v722
        %v835 = vpack.c.b16 %v731, %v723
        %v836 = vpack.c.b16 %v732, %v724
        %v837 = vpack.c.b16 %v733, %v725
        %v838 = vpack.c.b16 %v734, %v726
        %v839 = vpack.c.b16 %v735, %v727
        %v840 = vpack.c.b16 %v736, %v728
        %v841 = vpack.c.b16 %v737, %v729
        %v842 = vpack.c.b16 %v746, %v738
        %v843 = vpack.c.b16 %v747, %v739
        %v844 = vpack.c.b16 %v748, %v740
        %v845 = vpack.c.b16 %v749, %v741
        %v846 = vpack.c.b16 %v750, %v742
        %v847 = vpack.c.b16 %v751, %v743
        %v848 = vpack.c.b16 %v752, %v744
        %v849 = vpack.c.b16 %v753, %v745
        %v850 = vpack.c.b16 %v762, %v754
        %v851 = vpack.c.b16 %v763, %v755
        %v852 = vpack.c.b16 %v764, %v756
        %v853 = vpack.c.b16 %v765, %v757
        %v854 = vpack.c.b16 %v766, %v758
        %v855 = vpack.c.b16 %v767, %v759
        %v856 = vpack.c.b16 %v768, %v760
        %v857 = vpack.c.b16 %v769, %v761
        %v858 = vpack.c.b16 %v778, %v770
        %v859 = vpack.c.b16 %v779, %v771
        %v860 = vpack.c.b16 %v780, %v772
        %v861 = vpack.c.b16 %v781, %v773
        %v862 = vpack.c.b16 %v782, %v774
        %v863 = vpack.c.b16 %v783, %v775
        %v864 = vpack.c.b16 %v784, %v776
        %v865 = vpack.c.b16 %v785, %v777
        %v866 = vpack.c.b16 %v794, %v786
        %v867 = vpack.c.b16 %v795, %v787
        %v868 = vpack.c.b16 %v796, %v788
        %v869 = vpack.c.b16 %v797, %v789
        %v870 = vpack.c.b16 %v798, %v790
        %v871 = vpack.c.b16 %v799, %v791
        %v872 = vpack.c.b16 %v800, %v792
        %v873 = vpack.c.b16 %v801, %v793
        %v874 = vpack.c.b16 %v810, %v802
        %v875 = vpack.c.b16 %v811, %v803
        %v876 = vpack.c.b16 %v812, %v804
        %v877 = vpack.c.b16 %v813, %v805
        %v878 = vpack.c.b16 %v814, %v806
        %v879 = vpack.c.b16 %v815, %v807
        %v880 = vpack.c.b16 %v816, %v808
        %v881 = vpack.c.b16 %v817, %v809
        %946 = vmatprep.subr.bf16.mxu0 %v819
        %947 = vmatpush1.bf16.msra.mxu0 %v818
        %948 = vmatprep.subr.bf16.mxu0 %v827
        %949 = vmatpush1.bf16.msra.mxu0 %v826
        %950 = vmatprep.subr.bf16.mxu0 %v835
        %951 = vmatpush1.bf16.msra.mxu0 %v834
        %952 = vmatprep.subr.bf16.mxu0 %v843
        %953 = vmatpush1.bf16.msra.mxu0 %v842
        %954 = vmatprep.subr.bf16.mxu0 %v851
        %955 = vmatpush1.bf16.msra.mxu0 %v850
        %956 = vmatprep.subr.bf16.mxu0 %v859
        %957 = vmatpush1.bf16.msra.mxu0 %v858
        %958 = vmatprep.subr.bf16.mxu0 %v867
        %959 = vmatpush1.bf16.msra.mxu0 %v866
        %960 = vmatprep.subr.bf16.mxu0 %v875
        %961 = vmatpush1.bf16.msra.mxu0 %v874
        %962 = vmatprep.subr.bf16.mxu0 0
        %963 = vmatpush1.bf16.msra.mxu0 0
        %964 = vmatprep.subr.bf16.mxu0 0
        %965 = vmatpush1.bf16.msra.mxu0 0
        %966 = vmatprep.subr.bf16.mxu0 0
        %967 = vmatpush1.bf16.msra.mxu0 0
        %968 = vmatprep.subr.bf16.mxu0 0
        %969 = vmatpush1.bf16.msra.mxu0 0
        %970 = vmatprep.subr.bf16.mxu0 0
        %971 = vmatpush1.bf16.msra.mxu0 0
        %972 = vmatprep.subr.bf16.mxu0 0
        %973 = vmatpush1.bf16.msra.mxu0 0
        %974 = vmatprep.subr.bf16.mxu0 0
        %975 = vmatpush1.bf16.msra.mxu0 0
        %976 = vmatprep.subr.bf16.mxu0 0
        %977 = vmatpush1.bf16.msra.mxu0 0
        %978 = vmatprep.mubr.bf16.mxu0 0
        %979 = vmatmul.mubr.bf16.gmra.mrb[0].mxu0 %v560
        %v980 = vpop.f32.mrb[0].mxu0
        %v981 = vadd.f32 0.0, %v980
        %v982 = vpop.f32.mrb[0].mxu0
        %v983 = vadd.f32 0.0, %v982
        %v984 = vpop.f32.mrb[0].mxu0
        %v985 = vadd.f32 0.0, %v984
        %v986 = vpop.f32.mrb[0].mxu0
        %v987 = vadd.f32 0.0, %v986
        %988 = vmatprep.mubr.bf16.mxu0 0
        %989 = vmatmul.mubr.bf16.gmra.mrb[0].mxu0 %v561
        %v990 = vpop.f32.mrb[0].mxu0
        %v991 = vadd.f32 0.0, %v990
        %v992 = vpop.f32.mrb[0].mxu0
        %v993 = vadd.f32 0.0, %v992
        %v994 = vpop.f32.mrb[0].mxu0
        %v995 = vadd.f32 0.0, %v994
        %v996 = vpop.f32.mrb[0].mxu0
        %v997 = vadd.f32 0.0, %v996
        %998 = vdwg.mxu0
        %999 = vmatprep.subr.bf16.mxu0 %v821
        %1000 = vmatpush1.bf16.msra.mxu0 %v820
        %1001 = vmatprep.subr.bf16.mxu0 %v829
        %1002 = vmatpush1.bf16.msra.mxu0 %v828
        %1003 = vmatprep.subr.bf16.mxu0 %v837
        %1004 = vmatpush1.bf16.msra.mxu0 %v836
        %1005 = vmatprep.subr.bf16.mxu0 %v845
        %1006 = vmatpush1.bf16.msra.mxu0 %v844
        %1007 = vmatprep.subr.bf16.mxu0 %v853
        %1008 = vmatpush1.bf16.msra.mxu0 %v852
        %1009 = vmatprep.subr.bf16.mxu0 %v861
        %1010 = vmatpush1.bf16.msra.mxu0 %v860
        %1011 = vmatprep.subr.bf16.mxu0 %v869
        %1012 = vmatpush1.bf16.msra.mxu0 %v868
        %1013 = vmatprep.subr.bf16.mxu0 %v877
        %1014 = vmatpush1.bf16.msra.mxu0 %v876
        %1015 = vmatprep.subr.bf16.mxu0 0
        %1016 = vmatpush1.bf16.msra.mxu0 0
        %1017 = vmatprep.subr.bf16.mxu0 0
        %1018 = vmatpush1.bf16.msra.mxu0 0
        %1019 = vmatprep.subr.bf16.mxu0 0
        %1020 = vmatpush1.bf16.msra.mxu0 0
        %1021 = vmatprep.subr.bf16.mxu0 0
        %1022 = vmatpush1.bf16.msra.mxu0 0
        %1023 = vmatprep.subr.bf16.mxu0 0
        %1024 = vmatpush1.bf16.msra.mxu0 0
        %1025 = vmatprep.subr.bf16.mxu0 0
        %1026 = vmatpush1.bf16.msra.mxu0 0
        %1027 = vmatprep.subr.bf16.mxu0 0
        %1028 = vmatpush1.bf16.msra.mxu0 0
        %1029 = vmatprep.subr.bf16.mxu0 0
        %1030 = vmatpush1.bf16.msra.mxu0 0
        %1031 = vmatprep.mubr.bf16.mxu0 0
        %1032 = vmatmul.mubr.bf16.gmra.mrb[0].mxu0 %v560
        %v1033 = vpop.f32.mrb[0].mxu0
        %v1034 = vadd.f32 0.0, %v1033
        %v1035 = vpop.f32.mrb[0].mxu0
        %v1036 = vadd.f32 0.0, %v1035
        %v1037 = vpop.f32.mrb[0].mxu0
        %v1038 = vadd.f32 0.0, %v1037
        %v1039 = vpop.f32.mrb[0].mxu0
        %v1040 = vadd.f32 0.0, %v1039
        %1041 = vmatprep.mubr.bf16.mxu0 0
        %1042 = vmatmul.mubr.bf16.gmra.mrb[0].mxu0 %v561
        %v1043 = vpop.f32.mrb[0].mxu0
        %v1044 = vadd.f32 0.0, %v1043
        %v1045 = vpop.f32.mrb[0].mxu0
        %v1046 = vadd.f32 0.0, %v1045
        %v1047 = vpop.f32.mrb[0].mxu0
        %v1048 = vadd.f32 0.0, %v1047
        %v1049 = vpop.f32.mrb[0].mxu0
        %v1050 = vadd.f32 0.0, %v1049
        %1051 = vdwg.mxu0
        %1052 = vmatprep.subr.bf16.mxu0 %v823
        %1053 = vmatpush1.bf16.msra.mxu0 %v822
        %1054 = vmatprep.subr.bf16.mxu0 %v831
        %1055 = vmatpush1.bf16.msra.mxu0 %v830
        %1056 = vmatprep.subr.bf16.mxu0 %v839
        %1057 = vmatpush1.bf16.msra.mxu0 %v838
        %1058 = vmatprep.subr.bf16.mxu0 %v847
        %1059 = vmatpush1.bf16.msra.mxu0 %v846
        %1060 = vmatprep.subr.bf16.mxu0 %v855
        %1061 = vmatpush1.bf16.msra.mxu0 %v854
        %1062 = vmatprep.subr.bf16.mxu0 %v863
        %1063 = vmatpush1.bf16.msra.mxu0 %v862
        %1064 = vmatprep.subr.bf16.mxu0 %v871
        %1065 = vmatpush1.bf16.msra.mxu0 %v870
        %1066 = vmatprep.subr.bf16.mxu0 %v879
        %1067 = vmatpush1.bf16.msra.mxu0 %v878
        %1068 = vmatprep.subr.bf16.mxu0 0
        %1069 = vmatpush1.bf16.msra.mxu0 0
        %1070 = vmatprep.subr.bf16.mxu0 0
        %1071 = vmatpush1.bf16.msra.mxu0 0
        %1072 = vmatprep.subr.bf16.mxu0 0
        %1073 = vmatpush1.bf16.msra.mxu0 0
        %1074 = vmatprep.subr.bf16.mxu0 0
        %1075 = vmatpush1.bf16.msra.mxu0 0
        %1076 = vmatprep.subr.bf16.mxu0 0
        %1077 = vmatpush1.bf16.msra.mxu0 0
        %1078 = vmatprep.subr.bf16.mxu0 0
        %1079 = vmatpush1.bf16.msra.mxu0 0
        %1080 = vmatprep.subr.bf16.mxu0 0
        %1081 = vmatpush1.bf16.msra.mxu0 0
        %1082 = vmatprep.subr.bf16.mxu0 0
        %1083 = vmatpush1.bf16.msra.mxu0 0
        %1084 = vmatprep.mubr.bf16.mxu0 0
        %1085 = vmatmul.mubr.bf16.gmra.mrb[0].mxu0 %v560
        %v1086 = vpop.f32.mrb[0].mxu0
        %v1087 = vadd.f32 0.0, %v1086
        %v1088 = vpop.f32.mrb[0].mxu0
        %v1089 = vadd.f32 0.0, %v1088
        %v1090 = vpop.f32.mrb[0].mxu0
        %v1091 = vadd.f32 0.0, %v1090
        %v1092 = vpop.f32.mrb[0].mxu0
        %v1093 = vadd.f32 0.0, %v1092
        %1094 = vmatprep.mubr.bf16.mxu0 0
        %1095 = vmatmul.mubr.bf16.gmra.mrb[0].mxu0 %v561
        %v1096 = vpop.f32.mrb[0].mxu0
        %v1097 = vadd.f32 0.0, %v1096
        %v1098 = vpop.f32.mrb[0].mxu0
        %v1099 = vadd.f32 0.0, %v1098
        %v1100 = vpop.f32.mrb[0].mxu0
        %v1101 = vadd.f32 0.0, %v1100
        %v1102 = vpop.f32.mrb[0].mxu0
        %v1103 = vadd.f32 0.0, %v1102
        %1104 = vdwg.mxu0
        %1105 = vmatprep.subr.bf16.mxu0 %v825
        %1106 = vmatpush1.bf16.msra.mxu0 %v824
        %1107 = vmatprep.subr.bf16.mxu0 %v833
        %1108 = vmatpush1.bf16.msra.mxu0 %v832
        %1109 = vmatprep.subr.bf16.mxu0 %v841
        %1110 = vmatpush1.bf16.msra.mxu0 %v840
        %1111 = vmatprep.subr.bf16.mxu0 %v849
        %1112 = vmatpush1.bf16.msra.mxu0 %v848
        %1113 = vmatprep.subr.bf16.mxu0 %v857
        %1114 = vmatpush1.bf16.msra.mxu0 %v856
        %1115 = vmatprep.subr.bf16.mxu0 %v865
        %1116 = vmatpush1.bf16.msra.mxu0 %v864
        %1117 = vmatprep.subr.bf16.mxu0 %v873
        %1118 = vmatpush1.bf16.msra.mxu0 %v872
        %1119 = vmatprep.subr.bf16.mxu0 %v881
        %1120 = vmatpush1.bf16.msra.mxu0 %v880
        %1121 = vmatprep.subr.bf16.mxu0 0
        %1122 = vmatpush1.bf16.msra.mxu0 0
        %1123 = vmatprep.subr.bf16.mxu0 0
        %1124 = vmatpush1.bf16.msra.mxu0 0
        %1125 = vmatprep.subr.bf16.mxu0 0
        %1126 = vmatpush1.bf16.msra.mxu0 0
        %1127 = vmatprep.subr.bf16.mxu0 0
        %1128 = vmatpush1.bf16.msra.mxu0 0
        %1129 = vmatprep.subr.bf16.mxu0 0
        %1130 = vmatpush1.bf16.msra.mxu0 0
        %1131 = vmatprep.subr.bf16.mxu0 0
        %1132 = vmatpush1.bf16.msra.mxu0 0
        %1133 = vmatprep.subr.bf16.mxu0 0
        %1134 = vmatpush1.bf16.msra.mxu0 0
        %1135 = vmatprep.subr.bf16.mxu0 0
        %1136 = vmatpush1.bf16.msra.mxu0 0
        %1137 = vmatprep.mubr.bf16.mxu0 0
        %1138 = vmatmul.mubr.bf16.gmra.mrb[0].mxu0 %v560
        %v1139 = vpop.f32.mrb[0].mxu0
        %v1140 = vadd.f32 0.0, %v1139
        %v1141 = vpop.f32.mrb[0].mxu0
        %v1142 = vadd.f32 0.0, %v1141
        %v1143 = vpop.f32.mrb[0].mxu0
        %v1144 = vadd.f32 0.0, %v1143
        %v1145 = vpop.f32.mrb[0].mxu0
        %v1146 = vadd.f32 0.0, %v1145
        %1147 = vmatprep.mubr.bf16.mxu0 0
        %1148 = vmatmul.mubr.bf16.gmra.mrb[0].mxu0 %v561
        %v1149 = vpop.f32.mrb[0].mxu0
        %v1150 = vadd.f32 0.0, %v1149
        %v1151 = vpop.f32.mrb[0].mxu0
        %v1152 = vadd.f32 0.0, %v1151
        %v1153 = vpop.f32.mrb[0].mxu0
        %v1154 = vadd.f32 0.0, %v1153
        %v1155 = vpop.f32.mrb[0].mxu0
        %v1156 = vadd.f32 0.0, %v1155
        %1157 = vdwg.mxu0
        %p1158 = scmp.ne.s32.totalorder %s28, 0
        // Predicated region
        $region61: #{tpu_custom_call.1} parent=47 // pred_check
          %p1159 = pneg %p1158
        $region62: #{tpu_custom_call.1} parent=47 // pred_check_branch
          %1161 = sbr.rel (%p1159) target = $region64
        $region63: #{tpu_custom_call.1} parent=47 // pred_region
          %v1162 = vmax.f32 %v981, %v985
          %v1163 = vmax.f32 %v1162, %v991
          %v1164 = vmax.f32 %v1163, %v995
          %v1165 = vmax.f32 %v983, %v987
          %v1166 = vmax.f32 %v1165, %v993
          %v1167 = vmax.f32 %v1166, %v997
          %v1168 = vmax.f32 %v1034, %v1038
          %v1169 = vmax.f32 %v1168, %v1044
          %v1170 = vmax.f32 %v1169, %v1048
          %v1171 = vmax.f32 %v1036, %v1040
          %v1172 = vmax.f32 %v1171, %v1046
          %v1173 = vmax.f32 %v1172, %v1050
          %v1174 = vmax.f32 %v1087, %v1091
          %v1175 = vmax.f32 %v1174, %v1097
          %v1176 = vmax.f32 %v1175, %v1101
          %v1177 = vmax.f32 %v1089, %v1093
          %v1178 = vmax.f32 %v1177, %v1099
          %v1179 = vmax.f32 %v1178, %v1103
          %v1180 = vmax.f32 %v1140, %v1144
          %v1181 = vmax.f32 %v1180, %v1150
          %v1182 = vmax.f32 %v1181, %v1154
          %v1183 = vmax.f32 %v1142, %v1146
          %v1184 = vmax.f32 %v1183, %v1152
          %v1185 = vmax.f32 %v1184, %v1156
          %v1186 = vld [vmem:[#allocation2] sm:$0xff]
          %v1187 = vld [vmem:[#allocation2 + $0x8] sm:$0xff]
          %v1188 = vld [vmem:[#allocation2 + $0x10] sm:$0xff]
          %v1189 = vld [vmem:[#allocation2 + $0x18] sm:$0xff]
          %v1190 = vld [vmem:[#allocation2 + $0x20] sm:$0xff]
          %v1191 = vld [vmem:[#allocation2 + $0x28] sm:$0xff]
          %v1192 = vld [vmem:[#allocation2 + $0x30] sm:$0xff]
          %v1193 = vld [vmem:[#allocation2 + $0x38] sm:$0xff]
          %v1194 = vmax.f32 %v1186, %v1164
          %v1195 = vmax.f32 %v1187, %v1167
          %v1196 = vmax.f32 %v1188, %v1170
          %v1197 = vmax.f32 %v1189, %v1173
          %v1198 = vmax.f32 %v1190, %v1176
          %v1199 = vmax.f32 %v1191, %v1179
          %v1200 = vmax.f32 %v1192, %v1182
          %v1201 = vmax.f32 %v1193, %v1185
          %1202 = vst [vmem:[#allocation2] sm:$0xff] %v1194
          %1203 = vst [vmem:[#allocation2 + $0x8] sm:$0xff] %v1195
          %1204 = vst [vmem:[#allocation2 + $0x10] sm:$0xff] %v1196
          %1205 = vst [vmem:[#allocation2 + $0x18] sm:$0xff] %v1197
          %1206 = vst [vmem:[#allocation2 + $0x20] sm:$0xff] %v1198
          %1207 = vst [vmem:[#allocation2 + $0x28] sm:$0xff] %v1199
          %1208 = vst [vmem:[#allocation2 + $0x30] sm:$0xff] %v1200
          %1209 = vst [vmem:[#allocation2 + $0x38] sm:$0xff] %v1201
        $region64: #{tpu_custom_call.1} parent=47 // pred_fallthru
          _
        // Predicated region
        $region65: #{tpu_custom_call.1} parent=47 // pred_check
          %p1210 = pneg %p336
        $region66: #{tpu_custom_call.1} parent=47 // pred_check_branch
          %1212 = sbr.rel (%p1210) target = $region68
        $region67: #{tpu_custom_call.1} parent=47 // pred_region
          %s1213 = smul.u32 %s28, 32
          %v1214 = vlaneseq
          %v1215 = vshrl.u32 %v1214, 7
          %v1216 = vadd.s32 %v1215, 8
          %v1217 = vadd.s32 %v1215, 16
          %v1218 = vadd.s32 %v1215, 24
          %v1219 = vstv %s1213
          %v1220 = vadd.s32 %v1219, %v1215
          %v1221 = vadd.s32 %v1219, %v1216
          %v1222 = vadd.s32 %v1219, %v1217
          %v1223 = vadd.s32 %v1219, %v1218
          %vm1224 = vcmp.lt.s32.totalorder %v1220, 24
          %vm1225 = vcmp.lt.s32.totalorder %v1221, 24
          %vm1226 = vcmp.lt.s32.totalorder %v1222, 24
          %vm1227 = vcmp.lt.s32.totalorder %v1223, 24
          %v1228 = vsel %vm1224, 1, 0
          %v1229 = vsel %vm1225, 1, 0
          %v1230 = vsel %vm1226, 1, 0
          %v1231 = vsel %vm1227, 1, 0
          %vm1232 = vcmp.eq.s32.totalorder %v1228, 1
          %vm1233 = vcmp.eq.s32.totalorder %v1229, 1
          %vm1234 = vcmp.eq.s32.totalorder %v1230, 1
          %vm1235 = vcmp.eq.s32.totalorder %v1231, 1
          %v1236 = vsel %vm1232, %v981, -inf
          %v1237 = vsel %vm1232, %v983, -inf
          %v1238 = vsel %vm1232, %v1034, -inf
          %v1239 = vsel %vm1232, %v1036, -inf
          %v1240 = vsel %vm1232, %v1087, -inf
          %v1241 = vsel %vm1232, %v1089, -inf
          %v1242 = vsel %vm1232, %v1140, -inf
          %v1243 = vsel %vm1232, %v1142, -inf
          %v1244 = vsel %vm1233, %v985, -inf
          %v1245 = vsel %vm1233, %v987, -inf
          %v1246 = vsel %vm1233, %v1038, -inf
          %v1247 = vsel %vm1233, %v1040, -inf
          %v1248 = vsel %vm1233, %v1091, -inf
          %v1249 = vsel %vm1233, %v1093, -inf
          %v1250 = vsel %vm1233, %v1144, -inf
          %v1251 = vsel %vm1233, %v1146, -inf
          %v1252 = vsel %vm1234, %v991, -inf
          %v1253 = vsel %vm1234, %v993, -inf
          %v1254 = vsel %vm1234, %v1044, -inf
          %v1255 = vsel %vm1234, %v1046, -inf
          %v1256 = vsel %vm1234, %v1097, -inf
          %v1257 = vsel %vm1234, %v1099, -inf
          %v1258 = vsel %vm1234, %v1150, -inf
          %v1259 = vsel %vm1234, %v1152, -inf
          %v1260 = vsel %vm1235, %v995, -inf
          %v1261 = vsel %vm1235, %v997, -inf
          %v1262 = vsel %vm1235, %v1048, -inf
          %v1263 = vsel %vm1235, %v1050, -inf
          %v1264 = vsel %vm1235, %v1101, -inf
          %v1265 = vsel %vm1235, %v1103, -inf
          %v1266 = vsel %vm1235, %v1154, -inf
          %v1267 = vsel %vm1235, %v1156, -inf
          %v1268 = vmax.f32 %v1236, %v1244
          %v1269 = vmax.f32 %v1268, %v1252
          %v1270 = vmax.f32 %v1269, %v1260
          %v1271 = vmax.f32 %v1237, %v1245
          %v1272 = vmax.f32 %v1271, %v1253
          %v1273 = vmax.f32 %v1272, %v1261
          %v1274 = vmax.f32 %v1238, %v1246
          %v1275 = vmax.f32 %v1274, %v1254
          %v1276 = vmax.f32 %v1275, %v1262
          %v1277 = vmax.f32 %v1239, %v1247
          %v1278 = vmax.f32 %v1277, %v1255
          %v1279 = vmax.f32 %v1278, %v1263
          %v1280 = vmax.f32 %v1240, %v1248
          %v1281 = vmax.f32 %v1280, %v1256
          %v1282 = vmax.f32 %v1281, %v1264
          %v1283 = vmax.f32 %v1241, %v1249
          %v1284 = vmax.f32 %v1283, %v1257
          %v1285 = vmax.f32 %v1284, %v1265
          %v1286 = vmax.f32 %v1242, %v1250
          %v1287 = vmax.f32 %v1286, %v1258
          %v1288 = vmax.f32 %v1287, %v1266
          %v1289 = vmax.f32 %v1243, %v1251
          %v1290 = vmax.f32 %v1289, %v1259
          %v1291 = vmax.f32 %v1290, %v1267
          %v1292 = vld [vmem:[#allocation2] sm:$0xff]
          %v1293 = vld [vmem:[#allocation2 + $0x8] sm:$0xff]
          %v1294 = vld [vmem:[#allocation2 + $0x10] sm:$0xff]
          %v1295 = vld [vmem:[#allocation2 + $0x18] sm:$0xff]
          %v1296 = vld [vmem:[#allocation2 + $0x20] sm:$0xff]
          %v1297 = vld [vmem:[#allocation2 + $0x28] sm:$0xff]
          %v1298 = vld [vmem:[#allocation2 + $0x30] sm:$0xff]
          %v1299 = vld [vmem:[#allocation2 + $0x38] sm:$0xff]
          %v1300 = vmax.f32 %v1292, %v1270
          %v1301 = vmax.f32 %v1293, %v1273
          %v1302 = vmax.f32 %v1294, %v1276
          %v1303 = vmax.f32 %v1295, %v1279
          %v1304 = vmax.f32 %v1296, %v1282
          %v1305 = vmax.f32 %v1297, %v1285
          %v1306 = vmax.f32 %v1298, %v1288
          %v1307 = vmax.f32 %v1299, %v1291
          %1308 = vst [vmem:[#allocation2] sm:$0xff] %v1300
          %1309 = vst [vmem:[#allocation2 + $0x8] sm:$0xff] %v1301
          %1310 = vst [vmem:[#allocation2 + $0x10] sm:$0xff] %v1302
          %1311 = vst [vmem:[#allocation2 + $0x18] sm:$0xff] %v1303
          %1312 = vst [vmem:[#allocation2 + $0x20] sm:$0xff] %v1304
          %1313 = vst [vmem:[#allocation2 + $0x28] sm:$0xff] %v1305
          %1314 = vst [vmem:[#allocation2 + $0x30] sm:$0xff] %v1306
          %1315 = vst [vmem:[#allocation2 + $0x38] sm:$0xff] %v1307
          %v1316 = vld [vmem:[#allocation2] sm:$0xff]
          %v1317 = vld [vmem:[#allocation2 + $0x8] sm:$0xff]
          %v1318 = vld [vmem:[#allocation2 + $0x10] sm:$0xff]
          %v1319 = vld [vmem:[#allocation2 + $0x18] sm:$0xff]
          %v1320 = vld [vmem:[#allocation2 + $0x20] sm:$0xff]
          %v1321 = vld [vmem:[#allocation2 + $0x28] sm:$0xff]
          %v1322 = vld [vmem:[#allocation2 + $0x30] sm:$0xff]
          %v1323 = vld [vmem:[#allocation2 + $0x38] sm:$0xff]
          %v1324 = vrot.slane %v1316, 4
          %v1325 = vmax.f32 %v1316, %v1324
          %v1326 = vrot.slane %v1325, 2
          %v1327 = vmax.f32 %v1325, %v1326
          %v1328 = vrot.slane %v1327, 1
          %v1329 = vmax.f32 %v1327, %v1328
          %v1330 = vrot.slane %v1317, 4
          %v1331 = vmax.f32 %v1317, %v1330
          %v1332 = vrot.slane %v1331, 2
          %v1333 = vmax.f32 %v1331, %v1332
          %v1334 = vrot.slane %v1333, 1
          %v1335 = vmax.f32 %v1333, %v1334
          %v1336 = vrot.slane %v1318, 4
          %v1337 = vmax.f32 %v1318, %v1336
          %v1338 = vrot.slane %v1337, 2
          %v1339 = vmax.f32 %v1337, %v1338
          %v1340 = vrot.slane %v1339, 1
          %v1341 = vmax.f32 %v1339, %v1340
          %v1342 = vrot.slane %v1319, 4
          %v1343 = vmax.f32 %v1319, %v1342
          %v1344 = vrot.slane %v1343, 2
          %v1345 = vmax.f32 %v1343, %v1344
          %v1346 = vrot.slane %v1345, 1
          %v1347 = vmax.f32 %v1345, %v1346
          %v1348 = vrot.slane %v1320, 4
          %v1349 = vmax.f32 %v1320, %v1348
          %v1350 = vrot.slane %v1349, 2
          %v1351 = vmax.f32 %v1349, %v1350
          %v1352 = vrot.slane %v1351, 1
          %v1353 = vmax.f32 %v1351, %v1352
          %v1354 = vrot.slane %v1321, 4
          %v1355 = vmax.f32 %v1321, %v1354
          %v1356 = vrot.slane %v1355, 2
          %v1357 = vmax.f32 %v1355, %v1356
          %v1358 = vrot.slane %v1357, 1
          %v1359 = vmax.f32 %v1357, %v1358
          %v1360 = vrot.slane %v1322, 4
          %v1361 = vmax.f32 %v1322, %v1360
          %v1362 = vrot.slane %v1361, 2
          %v1363 = vmax.f32 %v1361, %v1362
          %v1364 = vrot.slane %v1363, 1
          %v1365 = vmax.f32 %v1363, %v1364
          %v1366 = vrot.slane %v1323, 4
          %v1367 = vmax.f32 %v1323, %v1366
          %v1368 = vrot.slane %v1367, 2
          %v1369 = vmax.f32 %v1367, %v1368
          %v1370 = vrot.slane %v1369, 1
          %v1371 = vmax.f32 %v1369, %v1370
          %v1372 = vld [vmem:[%s6] sm:$0xff]
          %v1374 = vlaneseq
          %v1375 = vshrl.u32 %v1374, 7
          %v1376 = vsub.s32 0, %v1375
          %v1377 = vrot.slane %v1372, %v1376
          %v1378 = vlaneseq
          %v1379 = vshrl.u32 %v1378, 7
          %v1380 = vsub.s32 1, %v1379
          %v1381 = vrot.slane %v1372, %v1380
          %v1382 = vlaneseq
          %v1383 = vshrl.u32 %v1382, 7
          %v1384 = vsub.s32 2, %v1383
          %v1385 = vrot.slane %v1372, %v1384
          %v1386 = vlaneseq
          %v1387 = vshrl.u32 %v1386, 7
          %v1388 = vsub.s32 3, %v1387
          %v1389 = vrot.slane %v1372, %v1388
          %v1390 = vlaneseq
          %v1391 = vshrl.u32 %v1390, 7
          %v1392 = vsub.s32 4, %v1391
          %v1393 = vrot.slane %v1372, %v1392
          %v1394 = vlaneseq
          %v1395 = vshrl.u32 %v1394, 7
          %v1396 = vsub.s32 5, %v1395
          %v1397 = vrot.slane %v1372, %v1396
          %v1398 = vlaneseq
          %v1399 = vshrl.u32 %v1398, 7
          %v1400 = vsub.s32 6, %v1399
          %v1401 = vrot.slane %v1372, %v1400
          %v1402 = vlaneseq
          %v1403 = vshrl.u32 %v1402, 7
          %v1404 = vsub.s32 7, %v1403
          %v1405 = vrot.slane %v1372, %v1404
          %v1414 = vadd.f32 %v1329, %v1377
          %v1415 = vadd.f32 %v1335, %v1381
          %v1416 = vadd.f32 %v1341, %v1385
          %v1417 = vadd.f32 %v1347, %v1389
          %v1418 = vadd.f32 %v1353, %v1393
          %v1419 = vadd.f32 %v1359, %v1397
          %v1420 = vadd.f32 %v1365, %v1401
          %v1421 = vadd.f32 %v1371, %v1405
          %v1422 = vmax.f32 %v1414, 0.0
          %v1423 = vmax.f32 %v1415, 0.0
          %v1424 = vmax.f32 %v1416, 0.0
          %v1425 = vmax.f32 %v1417, 0.0
          %v1426 = vmax.f32 %v1418, 0.0
          %v1427 = vmax.f32 %v1419, 0.0
          %v1428 = vmax.f32 %v1420, 0.0
          %v1429 = vmax.f32 %v1421, 0.0
          %v1438 = vcombine.low %v1422, %v1423
          %v1439 = vcombine.low %v1424, %v1425
          %v1440 = vcombine.low %v1426, %v1427
          %v1441 = vcombine.low %v1428, %v1429
          %v1443 = vunpack.c.l.s4 1966171168
          %v1444 = vunpack.c.0.s8 %v1443
          %v1445 = vlaneseq
          %v1446 = vshrl.u32 %v1445, 7
          %v1447 = vsub.s32 %v1444, %v1446
          %v1448 = vrot.slane %v1438, %v1447
          %v1450 = vunpack.c.l.s4 1966171168
          %v1451 = vunpack.c.0.s8 %v1450
          %v1452 = vlaneseq
          %v1453 = vshrl.u32 %v1452, 7
          %v1454 = vsub.s32 %v1451, %v1453
          %v1455 = vrot.slane %v1439, %v1454
          %v1457 = vunpack.c.l.s4 1966171168
          %v1458 = vunpack.c.0.s8 %v1457
          %v1459 = vlaneseq
          %v1460 = vshrl.u32 %v1459, 7
          %v1461 = vsub.s32 %v1458, %v1460
          %v1462 = vrot.slane %v1440, %v1461
          %v1464 = vunpack.c.l.s4 1966171168
          %v1465 = vunpack.c.0.s8 %v1464
          %v1466 = vlaneseq
          %v1467 = vshrl.u32 %v1466, 7
          %v1468 = vsub.s32 %v1465, %v1467
          %v1469 = vrot.slane %v1441, %v1468
          %v1470 = vcombine.low %v1448, %v1455
          %v1471 = vcombine.low %v1462, %v1469
          %v1473 = vunpack.c.l.s4 1966171168
          %v1474 = vunpack.c.0.s8 %v1473
          %v1475 = vlaneseq
          %v1476 = vshrl.u32 %v1475, 7
          %v1477 = vsub.s32 %v1474, %v1476
          %v1478 = vrot.slane %v1470, %v1477
          %v1480 = vunpack.c.l.s4 1966171168
          %v1481 = vunpack.c.0.s8 %v1480
          %v1482 = vlaneseq
          %v1483 = vshrl.u32 %v1482, 7
          %v1484 = vsub.s32 %v1481, %v1483
          %v1485 = vrot.slane %v1471, %v1484
          %v1486 = vcombine.low %v1478, %v1485
          %1488 = vst [vmem:[%s324] sm:$0xff] %v1486
        $region68: #{tpu_custom_call.1} parent=47 // pred_fallthru
          _
        %s1489 = sand.u32 %s197, 1
        %s1490 = scalar_lea.sflag [#allocation5], %s1489
        %s1491 = sand.u32 %s197, 1
        %s1492 = smul.addr %s1491, 8
        %s1493 = scalar_lea.vmem [#allocation8], %s1492
        // Predicated region
        $region69: #{tpu_custom_call.1} parent=47 // pred_check
          %p1494 = pneg %p207
        $region70: #{tpu_custom_call.1} parent=47 // pred_check_branch
          %1496 = sbr.rel (%p1494) target = $region72
        $region71: #{tpu_custom_call.1} parent=47 // pred_region
          %s1498 = ssub.s32 128, 128
          %1499 = vsyncadd %s1490, %s1498
          %s1500 = smul.addr %s27, 8
          %s1501 = smul.addr %s1500, 16
          %s1502 = scalar_lea.hbm %s7, %s1501
          %s1504 = sshll.u32 %s1493, 4
          %s1505 = int_to_ptr.vmem [resolvable:$true] %s1504
          %1507 = dma.vmem_to_hbm [thread:$0]  %s1505, 128, %s1502, %s1490
        $region72: #{tpu_custom_call.1} parent=47 // pred_fallthru
          _
      $region48: #{tpu_custom_call.1} parent=5 // pred_fallthru
        _
      %p1508 = scmp.le.s32.totalorder 2, %s18
      // Predicated region
      $region73: #{tpu_custom_call.1} parent=5 // pred_check
        %p1509 = pneg %p1508
      $region74: #{tpu_custom_call.1} parent=5 // pred_check_branch
        %1511 = sbr.rel (%p1509) target = $region76
      $region75: #{tpu_custom_call.1} parent=5 // pred_region
        %s1512 = ssub.s32 %s18, 2
        // Predicated region
        $region77: #{tpu_custom_call.1} parent=75 // pred_check
          %p1513 = pneg %p213
        $region78: #{tpu_custom_call.1} parent=75 // pred_check_branch
          %1515 = sbr.rel (%p1513) target = $region80
        $region79: #{tpu_custom_call.1} parent=75 // pred_region
          %s1516 = sand.u32 %s198, 1
          %s1517 = scalar_lea.sflag [#allocation5], %s1516
          %s1518 = sand.u32 %s198, 1
          %s1519 = smul.addr %s1518, 8
          %s1520 = scalar_lea.vmem [#allocation8], %s1519
          %1521 = dma.done %s1517, 128
        $region80: #{tpu_custom_call.1} parent=75 // pred_fallthru
          _
      $region76: #{tpu_custom_call.1} parent=5 // pred_fallthru
        _
    $region6: #{tpu_custom_call.1} parent=1 // loop_footer
      %s22 = sadd.s32 1, %s18
    $region7: #{tpu_custom_call.1} parent=1 // loop_footer_branch
      %17 = sbr.rel target = $region3
    $region8: #{tpu_custom_call.1} parent=1 // loop_exit
      _
    %1522 = vsyncpa [#allocation4], 1
    %s1523 = scalar_lea.sflag [#allocation4], 1
    %1524 = vsyncpa %s1523, 1
    %1525 = vsyncpa [#allocation7], 1
    %1526 = vsyncpa [#allocation5], 1
    %s1527 = scalar_lea.sflag [#allocation5], 1
    %1528 = vsyncpa %s1527, 1

</llo_original>
